<compile_context>
chip_gen: v6e
topology: v6e:2x2x1
jax: 0.10.0
libtpu: 0.0.40
codegen_flags: <defaults>
</compile_context>

<pallas_src>
import functools
import math

import jax
import jax.numpy as jnp
import numpy as np
from jax.experimental import pallas as pl
from jax.experimental.pallas import tpu as pltpu


def _layernorm(z, g, b, eps=1e-5):
    mu = jnp.mean(z, axis=-1, keepdims=True)
    var = jnp.mean((z - mu) ** 2, axis=-1, keepdims=True)
    return (z - mu) * jax.lax.rsqrt(var + eps) * g + b


def _block_kernel(num_heads, head_dim, tq,
                  x_ref,
                  g1_ref, b1_ref, wq_ref, wkv_ref, wp_ref, bp_ref,
                  g3_ref, b3_ref, w1_ref, bb1_ref, w2_ref, bb2_ref,
                  o_ref,
                  xn_sc, k_sc, v_sc, q_sc, attn_sc):
    """Grid = (batch, q_tile). One step: attention + MLP for one query tile."""
    C = num_heads * head_dim
    hd = head_dim
    scale = head_dim ** -0.5
    qt = pl.program_id(1)

    # ---- LN1 + K/V over the full sequence: compute once per batch element --
    @pl.when(qt == 0)
    def _():
        xf = x_ref[0].astype(jnp.float32)                         # (N, C)
        xn_sc[...] = _layernorm(xf, g1_ref[0], b1_ref[0]).astype(jnp.bfloat16)
        kv = jnp.dot(xn_sc[...], wkv_ref[...],
                     preferred_element_type=jnp.float32)          # (N, 2C) f32
        for h in range(num_heads):                                # static loop
            k_sc[h] = kv[:, h * hd:(h + 1) * hd].astype(jnp.bfloat16)
            v_sc[h] = kv[:, C + h * hd:C + (h + 1) * hd].astype(jnp.bfloat16)

    # ---- queries for this tile (reuse LN1 scratch; scale folded into q) ----
    start = pl.multiple_of(qt * tq, tq)
    x_tile = x_ref[0, pl.ds(start, tq), :].astype(jnp.float32)    # (tq, C) f32
    xn_t = xn_sc[pl.ds(start, tq), :]                             # (tq, C) bf16
    q = jnp.dot(xn_t, wq_ref[...], preferred_element_type=jnp.float32) * scale
    for h in range(num_heads):
        q_sc[h] = q[:, h * hd:(h + 1) * hd].astype(jnp.bfloat16)  # (H, tq, hd)

    # ---- attention: heads batched on the MXU, softmax stats in f32 ---------
    s = jnp.einsum("hqd,hkd->hqk", q_sc[...], k_sc[...],
                   preferred_element_type=jnp.float32)            # (H, tq, N)
    s = s - jnp.max(s, axis=-1, keepdims=True)
    p = jnp.exp(s)
    inv = pl.reciprocal(jnp.sum(p, axis=-1, keepdims=True), approx=True)
    p = (p * inv).astype(jnp.bfloat16)
    o3 = jnp.einsum("hqk,hkd->hqd", p, v_sc[...],
                    preferred_element_type=jnp.float32)           # (H, tq, hd)
    for h in range(num_heads):                                    # merge heads
        attn_sc[:, h * hd:(h + 1) * hd] = o3[h].astype(jnp.bfloat16)

    attn = jnp.dot(attn_sc[...], wp_ref[...],
                   preferred_element_type=jnp.float32) + bp_ref[0]
    xres = x_tile + attn                                          # residual 1

    # ---- MLP ----------------------------------------------------------------
    xn2 = _layernorm(xres, g3_ref[0], b3_ref[0]).astype(jnp.bfloat16)
    h1 = jnp.dot(xn2, w1_ref[...], preferred_element_type=jnp.float32) + bb1_ref[0]
    # exact (erf-based) GELU, matching torch.nn.GELU default
    h1 = 0.5 * h1 * (1.0 + jax.lax.erf(h1 * (1.0 / math.sqrt(2.0))))
    y = jnp.dot(h1.astype(jnp.bfloat16), w2_ref[...],
                preferred_element_type=jnp.float32) + bb2_ref[0]
    o_ref[0] = (xres + y).astype(o_ref.dtype)                     # residual 2


def _pick_q_tile(n, target):
    """Largest divisor of n that is <= target (so in-kernel pl.ds never OOBs)."""
    if n <= target:
        return n
    for t in range(target, 0, -1):
        if n % t == 0:
            return t
    return n


def block_forward(x, params, num_heads, *, q_tile=128):
    """x: (B, N, C) float32. params: dict from init_params (bf16 weights)."""
    B, N, C = x.shape
    head_dim = C // num_heads
    Hm = params["w1"].shape[1]
    tq = _pick_q_tile(N, q_tile)
    num_q = N // tq

    def rep_spec(shape):
        # weights / norm params: same block for every grid step
        return pl.BlockSpec(shape, lambda b, t: (0,) * len(shape))

    kernel = functools.partial(_block_kernel, num_heads, head_dim, tq)

    # ---- VMEM budget (double-buffered IO + scratch + intermediates) --------
    w_bytes = 2 * (C * C + 2 * C * C + C * C + C * Hm + Hm * C)        # bf16
    io_bytes = 2 * (4 * N * C + 4 * tq * C)                            # x in / out blocks
    scr_bytes = (2 * N * C            # xn  bf16
                 + 2 * 2 * N * C      # k,v bf16
                 + 2 * tq * C         # q   bf16
                 + 2 * tq * C)        # attn bf16
    inter_bytes = 4 * (2 * num_heads * tq * N + 2 * N * C + 2 * tq * Hm + tq * C)
    vmem_limit = 2 * w_bytes + io_bytes + scr_bytes + inter_bytes
    vmem_limit = min(max(int(1.5 * vmem_limit) + (8 << 20), 32 << 20), 96 << 20)

    flops = 2 * B * N * (4 * C * C + 2 * N * C + 2 * C * Hm)
    transc = B * N * (num_heads * N + Hm)
    bytes_acc = 8 * B * N * C + w_bytes

    return pl.pallas_call(
        kernel,
        out_shape=jax.ShapeDtypeStruct((B, N, C), x.dtype),
        grid_spec=pltpu.PrefetchScalarGridSpec(
            num_scalar_prefetch=0,
            grid=(B, num_q),
            in_specs=[
                pl.BlockSpec((1, N, C), lambda b, t: (b, 0, 0)),   # x (per batch)
                rep_spec((1, C)), rep_spec((1, C)),                # norm1 g, b
                rep_spec((C, C)),                                  # Wq   (bf16)
                rep_spec((C, 2 * C)),                              # Wkv  (bf16)
                rep_spec((C, C)), rep_spec((1, C)),                # proj W, b
                rep_spec((1, C)), rep_spec((1, C)),                # norm3 g, b
                rep_spec((C, Hm)), rep_spec((1, Hm)),              # fc1 W, b
                rep_spec((Hm, C)), rep_spec((1, C)),               # fc2 W, b
            ],
            out_specs=pl.BlockSpec((1, tq, C), lambda b, t: (b, t, 0)),
            scratch_shapes=[
                pltpu.VMEM((N, C), jnp.bfloat16),                     # LN1(x)
                pltpu.VMEM((num_heads, N, head_dim), jnp.bfloat16),   # K
                pltpu.VMEM((num_heads, N, head_dim), jnp.bfloat16),   # V
                pltpu.VMEM((num_heads, tq, head_dim), jnp.bfloat16),  # Q tile
                pltpu.VMEM((tq, C), jnp.bfloat16),                    # merged heads
            ],
        ),
        compiler_params=pltpu.CompilerParams(
            dimension_semantics=("parallel", "arbitrary"),
            vmem_limit_bytes=vmem_limit,
        ),
        cost_estimate=pl.CostEstimate(
            flops=int(flops),
            transcendentals=int(transc),
            bytes_accessed=int(bytes_acc),
        ),
    )(x,
      params["g1"], params["b1"], params["wq"], params["wkv"],
      params["wp"], params["bp"], params["g3"], params["b3"],
      params["w1"], params["bb1"], params["w2"], params["bb2"])


def init_params(key, dim, num_heads, mlp_ratio=4.0):
    hidden = int(dim * mlp_ratio)
    ks = jax.random.split(key, 8)
    std = 0.02

    def w(k, shape):
        return (std * jax.random.normal(k, shape, jnp.float32)).astype(jnp.bfloat16)

    return {
        "g1": jnp.ones((1, dim), jnp.float32),
        "b1": jnp.zeros((1, dim), jnp.float32),
        "wq": w(ks[0], (dim, dim)),
        "wkv": w(ks[1], (dim, 2 * dim)),
        "wp": w(ks[2], (dim, dim)),
        "bp": std * jax.random.normal(ks[3], (1, dim), jnp.float32),
        "g3": jnp.ones((1, dim), jnp.float32),
        "b3": jnp.zeros((1, dim), jnp.float32),
        "w1": w(ks[4], (dim, hidden)),
        "bb1": std * jax.random.normal(ks[5], (1, hidden), jnp.float32),
        "w2": w(ks[6], (hidden, dim)),
        "bb2": std * jax.random.normal(ks[7], (1, dim), jnp.float32),
    }


def block_reference(x, params, num_heads):
    """Pure-JAX reference mirroring the kernel's bf16-input / f32-accumulate
    matmuls (LayerNorm / softmax / residuals in f32), matching the PyTorch
    forward semantics."""
    B, N, C = x.shape
    hd = C // num_heads
    bf16, f32 = jnp.bfloat16, jnp.float32

    def ln(z, g, b):
        mu = jnp.mean(z, -1, keepdims=True)
        var = jnp.mean((z - mu) ** 2, -1, keepdims=True)
        return (z - mu) / jnp.sqrt(var + 1e-5) * g + b

    def mm(a, w):
        return jnp.dot(a.astype(bf16), w.astype(bf16), preferred_element_type=f32)

    xn = ln(x, params["g1"][0], params["b1"][0])
    q = mm(xn, params["wq"]) * (hd ** -0.5)
    kv = mm(xn, params["wkv"])
    k, v = kv[..., :C], kv[..., C:]
    q = q.reshape(B, N, num_heads, hd).transpose(0, 2, 1, 3).astype(bf16)
    k = k.reshape(B, N, num_heads, hd).transpose(0, 2, 1, 3).astype(bf16)
    v = v.reshape(B, N, num_heads, hd).transpose(0, 2, 1, 3).astype(bf16)
    s = jnp.einsum("bhqd,bhkd->bhqk", q, k, preferred_element_type=f32)
    p = jax.nn.softmax(s, axis=-1)
    o = jnp.einsum("bhqk,bhkd->bhqd", p.astype(bf16), v, preferred_element_type=f32)
    o = o.transpose(0, 2, 1, 3).reshape(B, N, C)
    x = x + mm(o, params["wp"]) + params["bp"][0]
    xn = ln(x, params["g3"][0], params["b3"][0])
    h1 = mm(xn, params["w1"]) + params["bb1"][0]
    h1 = 0.5 * h1 * (1.0 + jax.lax.erf(h1 / jnp.sqrt(2.0)))
    return x + mm(h1, params["w2"]) + params["bb2"][0]


if __name__ == "__main__":
    B, N, C = 2, 8, 32
    num_heads = 4

    key = jax.random.PRNGKey(0)
    kx, kp = jax.random.split(key)
    x = jax.random.normal(kx, (B, N, C), jnp.float32)
    params = init_params(kp, C, num_heads)

    out = jax.block_until_ready(block_forward(x, params, num_heads))
    ref = jax.block_until_ready(block_reference(x, params, num_heads))

    # Loose-ish tolerance: kernel uses approx reciprocal for the softmax
    # denominator; matmuls are bf16-in / f32-accumulate in both paths.
    np.testing.assert_allclose(np.asarray(out), np.asarray(ref),
                               rtol=1e-2, atol=1e-2)
    print("KERNEL_OK")
</pallas_src>

<mosaic_0001>
module attributes {stable_mosaic.version = 11 : i64} {
  func.func @_block_kernel(%arg0: i32, %arg1: i32, %arg2: memref<1x8x32xf32, #tpu.memory_space<vmem>>, %arg3: memref<1x32xf32, #tpu.memory_space<vmem>>, %arg4: memref<1x32xf32, #tpu.memory_space<vmem>>, %arg5: memref<32x32xbf16, #tpu.memory_space<vmem>>, %arg6: memref<32x64xbf16, #tpu.memory_space<vmem>>, %arg7: memref<32x32xbf16, #tpu.memory_space<vmem>>, %arg8: memref<1x32xf32, #tpu.memory_space<vmem>>, %arg9: memref<1x32xf32, #tpu.memory_space<vmem>>, %arg10: memref<1x32xf32, #tpu.memory_space<vmem>>, %arg11: memref<32x128xbf16, #tpu.memory_space<vmem>>, %arg12: memref<1x128xf32, #tpu.memory_space<vmem>>, %arg13: memref<128x32xbf16, #tpu.memory_space<vmem>>, %arg14: memref<1x32xf32, #tpu.memory_space<vmem>>, %arg15: memref<1x8x32xf32, #tpu.memory_space<vmem>>, %arg16: memref<8x32xbf16, #tpu.memory_space<vmem>>, %arg17: memref<4x8x8xbf16, #tpu.memory_space<vmem>>, %arg18: memref<4x8x8xbf16, #tpu.memory_space<vmem>>, %arg19: memref<4x8x8xbf16, #tpu.memory_space<vmem>>, %arg20: memref<8x32xbf16, #tpu.memory_space<vmem>>) attributes {dimension_semantics = [#tpu.dimension_semantics<parallel>, #tpu.dimension_semantics<arbitrary>], iteration_bounds = array<i64: 2, 1>, scalar_prefetch = 0 : i64, scratch_operands = 5 : i64, tpu.core_type = #tpu.core_type<tc>, window_params = [{transform_indices = @transform_0, window_bounds = array<i64: 1, 8, 32>}, {pipeline_mode = #tpu.pipeline_mode<synchronous>, transform_indices = @transform_1, window_bounds = array<i64: 1, 32>}, {pipeline_mode = #tpu.pipeline_mode<synchronous>, transform_indices = @transform_2, window_bounds = array<i64: 1, 32>}, {pipeline_mode = #tpu.pipeline_mode<synchronous>, transform_indices = @transform_3, window_bounds = array<i64: 32, 32>}, {pipeline_mode = #tpu.pipeline_mode<synchronous>, transform_indices = @transform_4, window_bounds = array<i64: 32, 64>}, {pipeline_mode = #tpu.pipeline_mode<synchronous>, transform_indices = @transform_5, window_bounds = array<i64: 32, 32>}, {pipeline_mode = #tpu.pipeline_mode<synchronous>, transform_indices = @transform_6, window_bounds = array<i64: 1, 32>}, {pipeline_mode = #tpu.pipeline_mode<synchronous>, transform_indices = @transform_7, window_bounds = array<i64: 1, 32>}, {pipeline_mode = #tpu.pipeline_mode<synchronous>, transform_indices = @transform_8, window_bounds = array<i64: 1, 32>}, {pipeline_mode = #tpu.pipeline_mode<synchronous>, transform_indices = @transform_9, window_bounds = array<i64: 32, 128>}, {pipeline_mode = #tpu.pipeline_mode<synchronous>, transform_indices = @transform_10, window_bounds = array<i64: 1, 128>}, {pipeline_mode = #tpu.pipeline_mode<synchronous>, transform_indices = @transform_11, window_bounds = array<i64: 128, 32>}, {pipeline_mode = #tpu.pipeline_mode<synchronous>, transform_indices = @transform_12, window_bounds = array<i64: 1, 32>}, {transform_indices = @transform_13, window_bounds = array<i64: 1, 8, 32>}]} {
    %c0_i32 = arith.constant 0 : i32
    %0 = arith.cmpi eq, %arg1, %c0_i32 : i32
    %1 = arith.extui %0 : i1 to i32
    %c0_i32_0 = arith.constant 0 : i32
    %2 = arith.cmpi ne, %1, %c0_i32_0 : i32
    scf.if %2 {
      %c0_65 = arith.constant 0 : index
      %c0_66 = arith.constant 0 : index
      %c0_67 = arith.constant 0 : index
      %131 = vector.load %arg2[%c0_65, %c0_66, %c0_67] : memref<1x8x32xf32, #tpu.memory_space<vmem>>, vector<1x8x32xf32>
      %132 = vector.shape_cast %131 : vector<1x8x32xf32> to vector<8x32xf32>
      %c0_68 = arith.constant 0 : index
      %c0_69 = arith.constant 0 : index
      %133 = vector.load %arg3[%c0_68, %c0_69] : memref<1x32xf32, #tpu.memory_space<vmem>>, vector<1x32xf32>
      %134 = vector.shape_cast %133 : vector<1x32xf32> to vector<32xf32>
      %c0_70 = arith.constant 0 : index
      %c0_71 = arith.constant 0 : index
      %135 = vector.load %arg4[%c0_70, %c0_71] : memref<1x32xf32, #tpu.memory_space<vmem>>, vector<1x32xf32>
      %136 = vector.shape_cast %135 : vector<1x32xf32> to vector<32xf32>
      %cst_72 = arith.constant dense<0.000000e+00> : vector<8xf32>
      %137 = vector.multi_reduction <add>, %132, %cst_72 [1] : vector<8x32xf32> to vector<8xf32>
      %138 = vector.shape_cast %137 : vector<8xf32> to vector<8x1xf32>
      %cst_73 = arith.constant 3.200000e+01 : f32
      %139 = vector.broadcast %cst_73 : f32 to vector<8x1xf32>
      %140 = arith.divf %138, %139 : vector<8x1xf32>
      %141 = vector.broadcast %140 : vector<8x1xf32> to vector<8x32xf32>
      %142 = arith.subf %132, %141 : vector<8x32xf32>
      %143 = arith.mulf %142, %142 : vector<8x32xf32>
      %cst_74 = arith.constant dense<0.000000e+00> : vector<8xf32>
      %144 = vector.multi_reduction <add>, %143, %cst_74 [1] : vector<8x32xf32> to vector<8xf32>
      %145 = vector.shape_cast %144 : vector<8xf32> to vector<8x1xf32>
      %cst_75 = arith.constant 3.200000e+01 : f32
      %146 = vector.broadcast %cst_75 : f32 to vector<8x1xf32>
      %147 = arith.divf %145, %146 : vector<8x1xf32>
      %148 = vector.broadcast %140 : vector<8x1xf32> to vector<8x32xf32>
      %149 = arith.subf %132, %148 : vector<8x32xf32>
      %cst_76 = arith.constant 9.99999974E-6 : f32
      %150 = vector.broadcast %cst_76 : f32 to vector<8x1xf32>
      %151 = arith.addf %147, %150 : vector<8x1xf32>
      %152 = math.rsqrt %151 : vector<8x1xf32>
      %153 = vector.broadcast %152 : vector<8x1xf32> to vector<8x32xf32>
      %154 = arith.mulf %149, %153 : vector<8x32xf32>
      %155 = vector.shape_cast %134 : vector<32xf32> to vector<1x32xf32>
      %156 = vector.broadcast %155 : vector<1x32xf32> to vector<8x32xf32>
      %157 = arith.mulf %154, %156 : vector<8x32xf32>
      %158 = vector.shape_cast %136 : vector<32xf32> to vector<1x32xf32>
      %159 = vector.broadcast %158 : vector<1x32xf32> to vector<8x32xf32>
      %160 = arith.addf %157, %159 : vector<8x32xf32>
      %161 = arith.truncf %160 : vector<8x32xf32> to vector<8x32xbf16>
      %c0_77 = arith.constant 0 : index
      %c0_78 = arith.constant 0 : index
      %162 = vector.load %arg16[%c0_77, %c0_78] : memref<8x32xbf16, #tpu.memory_space<vmem>>, vector<8x32xbf16>
      tpu.vector_store %arg16[%c0_77, %c0_78], %161 {strides = array<i32>} : memref<8x32xbf16, #tpu.memory_space<vmem>>, vector<8x32xbf16>,
      %c0_79 = arith.constant 0 : index
      %c0_80 = arith.constant 0 : index
      %163 = vector.load %arg16[%c0_79, %c0_80] : memref<8x32xbf16, #tpu.memory_space<vmem>>, vector<8x32xbf16>
      %c0_81 = arith.constant 0 : index
      %c0_82 = arith.constant 0 : index
      %164 = vector.load %arg6[%c0_81, %c0_82] : memref<32x64xbf16, #tpu.memory_space<vmem>>, vector<32x64xbf16>
      %cst_83 = arith.constant dense<0.000000e+00> : vector<8x64xf32>
      %165 = tpu.matmul %163, %164, %cst_83 {dimension_numbers = #tpu.dot_dimension_numbers<[1], [0], [0], [1], [0, 0, 1, 1], [], []>} : vector<8x32xbf16>, vector<32x64xbf16>, vector<8x64xf32> -> vector<8x64xf32>
      %166 = vector.extract_strided_slice %165 {offsets = [0, 0], sizes = [8, 8], strides = [1, 1]} : vector<8x64xf32> to vector<8x8xf32>
      %167 = arith.truncf %166 : vector<8x8xf32> to vector<8x8xbf16>
      %c0_84 = arith.constant 0 : index
      %c0_85 = arith.constant 0 : index
      %c0_86 = arith.constant 0 : index
      %168 = vector.load %arg17[%c0_84, %c0_85, %c0_86] : memref<4x8x8xbf16, #tpu.memory_space<vmem>>, vector<1x8x8xbf16>
      %169 = vector.shape_cast %168 : vector<1x8x8xbf16> to vector<8x8xbf16>
      %170 = vector.shape_cast %167 : vector<8x8xbf16> to vector<1x8x8xbf16>
      tpu.vector_store %arg17[%c0_84, %c0_85, %c0_86], %170 {strides = array<i32>} : memref<4x8x8xbf16, #tpu.memory_space<vmem>>, vector<1x8x8xbf16>,
      %171 = vector.extract_strided_slice %165 {offsets = [0, 32], sizes = [8, 8], strides = [1, 1]} : vector<8x64xf32> to vector<8x8xf32>
      %172 = arith.truncf %171 : vector<8x8xf32> to vector<8x8xbf16>
      %c0_87 = arith.constant 0 : index
      %c0_88 = arith.constant 0 : index
      %c0_89 = arith.constant 0 : index
      %173 = vector.load %arg18[%c0_87, %c0_88, %c0_89] : memref<4x8x8xbf16, #tpu.memory_space<vmem>>, vector<1x8x8xbf16>
      %174 = vector.shape_cast %173 : vector<1x8x8xbf16> to vector<8x8xbf16>
      %175 = vector.shape_cast %172 : vector<8x8xbf16> to vector<1x8x8xbf16>
      tpu.vector_store %arg18[%c0_87, %c0_88, %c0_89], %175 {strides = array<i32>} : memref<4x8x8xbf16, #tpu.memory_space<vmem>>, vector<1x8x8xbf16>,
      %176 = vector.extract_strided_slice %165 {offsets = [0, 8], sizes = [8, 8], strides = [1, 1]} : vector<8x64xf32> to vector<8x8xf32>
      %177 = arith.truncf %176 : vector<8x8xf32> to vector<8x8xbf16>
      %c1_90 = arith.constant 1 : index
      %c0_91 = arith.constant 0 : index
      %c0_92 = arith.constant 0 : index
      %178 = vector.load %arg17[%c1_90, %c0_91, %c0_92] : memref<4x8x8xbf16, #tpu.memory_space<vmem>>, vector<1x8x8xbf16>
      %179 = vector.shape_cast %178 : vector<1x8x8xbf16> to vector<8x8xbf16>
      %180 = vector.shape_cast %177 : vector<8x8xbf16> to vector<1x8x8xbf16>
      tpu.vector_store %arg17[%c1_90, %c0_91, %c0_92], %180 {strides = array<i32>} : memref<4x8x8xbf16, #tpu.memory_space<vmem>>, vector<1x8x8xbf16>,
      %181 = vector.extract_strided_slice %165 {offsets = [0, 40], sizes = [8, 8], strides = [1, 1]} : vector<8x64xf32> to vector<8x8xf32>
      %182 = arith.truncf %181 : vector<8x8xf32> to vector<8x8xbf16>
      %c1_93 = arith.constant 1 : index
      %c0_94 = arith.constant 0 : index
      %c0_95 = arith.constant 0 : index
      %183 = vector.load %arg18[%c1_93, %c0_94, %c0_95] : memref<4x8x8xbf16, #tpu.memory_space<vmem>>, vector<1x8x8xbf16>
      %184 = vector.shape_cast %183 : vector<1x8x8xbf16> to vector<8x8xbf16>
      %185 = vector.shape_cast %182 : vector<8x8xbf16> to vector<1x8x8xbf16>
      tpu.vector_store %arg18[%c1_93, %c0_94, %c0_95], %185 {strides = array<i32>} : memref<4x8x8xbf16, #tpu.memory_space<vmem>>, vector<1x8x8xbf16>,
      %186 = vector.extract_strided_slice %165 {offsets = [0, 16], sizes = [8, 8], strides = [1, 1]} : vector<8x64xf32> to vector<8x8xf32>
      %187 = arith.truncf %186 : vector<8x8xf32> to vector<8x8xbf16>
      %c2_96 = arith.constant 2 : index
      %c0_97 = arith.constant 0 : index
      %c0_98 = arith.constant 0 : index
      %188 = vector.load %arg17[%c2_96, %c0_97, %c0_98] : memref<4x8x8xbf16, #tpu.memory_space<vmem>>, vector<1x8x8xbf16>
      %189 = vector.shape_cast %188 : vector<1x8x8xbf16> to vector<8x8xbf16>
      %190 = vector.shape_cast %187 : vector<8x8xbf16> to vector<1x8x8xbf16>
      tpu.vector_store %arg17[%c2_96, %c0_97, %c0_98], %190 {strides = array<i32>} : memref<4x8x8xbf16, #tpu.memory_space<vmem>>, vector<1x8x8xbf16>,
      %191 = vector.extract_strided_slice %165 {offsets = [0, 48], sizes = [8, 8], strides = [1, 1]} : vector<8x64xf32> to vector<8x8xf32>
      %192 = arith.truncf %191 : vector<8x8xf32> to vector<8x8xbf16>
      %c2_99 = arith.constant 2 : index
      %c0_100 = arith.constant 0 : index
      %c0_101 = arith.constant 0 : index
      %193 = vector.load %arg18[%c2_99, %c0_100, %c0_101] : memref<4x8x8xbf16, #tpu.memory_space<vmem>>, vector<1x8x8xbf16>
      %194 = vector.shape_cast %193 : vector<1x8x8xbf16> to vector<8x8xbf16>
      %195 = vector.shape_cast %192 : vector<8x8xbf16> to vector<1x8x8xbf16>
      tpu.vector_store %arg18[%c2_99, %c0_100, %c0_101], %195 {strides = array<i32>} : memref<4x8x8xbf16, #tpu.memory_space<vmem>>, vector<1x8x8xbf16>,
      %196 = vector.extract_strided_slice %165 {offsets = [0, 24], sizes = [8, 8], strides = [1, 1]} : vector<8x64xf32> to vector<8x8xf32>
      %197 = arith.truncf %196 : vector<8x8xf32> to vector<8x8xbf16>
      %c3_102 = arith.constant 3 : index
      %c0_103 = arith.constant 0 : index
      %c0_104 = arith.constant 0 : index
      %198 = vector.load %arg17[%c3_102, %c0_103, %c0_104] : memref<4x8x8xbf16, #tpu.memory_space<vmem>>, vector<1x8x8xbf16>
      %199 = vector.shape_cast %198 : vector<1x8x8xbf16> to vector<8x8xbf16>
      %200 = vector.shape_cast %197 : vector<8x8xbf16> to vector<1x8x8xbf16>
      tpu.vector_store %arg17[%c3_102, %c0_103, %c0_104], %200 {strides = array<i32>} : memref<4x8x8xbf16, #tpu.memory_space<vmem>>, vector<1x8x8xbf16>,
      %201 = vector.extract_strided_slice %165 {offsets = [0, 56], sizes = [8, 8], strides = [1, 1]} : vector<8x64xf32> to vector<8x8xf32>
      %202 = arith.truncf %201 : vector<8x8xf32> to vector<8x8xbf16>
      %c3_105 = arith.constant 3 : index
      %c0_106 = arith.constant 0 : index
      %c0_107 = arith.constant 0 : index
      %203 = vector.load %arg18[%c3_105, %c0_106, %c0_107] : memref<4x8x8xbf16, #tpu.memory_space<vmem>>, vector<1x8x8xbf16>
      %204 = vector.shape_cast %203 : vector<1x8x8xbf16> to vector<8x8xbf16>
      %205 = vector.shape_cast %202 : vector<8x8xbf16> to vector<1x8x8xbf16>
      tpu.vector_store %arg18[%c3_105, %c0_106, %c0_107], %205 {strides = array<i32>} : memref<4x8x8xbf16, #tpu.memory_space<vmem>>, vector<1x8x8xbf16>,
    } else {
    }
    %c8_i32 = arith.constant 8 : i32
    %3 = arith.muli %arg1, %c8_i32 : i32
    %4 = tpu.assume_multiple %3, 8 : i32
    %c0 = arith.constant 0 : index
    %5 = arith.index_cast %4 : i32 to index
    %c0_1 = arith.constant 0 : index
    %6 = vector.load %arg2[%c0, %5, %c0_1] : memref<1x8x32xf32, #tpu.memory_space<vmem>>, vector<1x8x32xf32>
    %7 = vector.shape_cast %6 : vector<1x8x32xf32> to vector<8x32xf32>
    %8 = arith.index_cast %4 : i32 to index
    %c0_2 = arith.constant 0 : index
    %9 = vector.load %arg16[%8, %c0_2] : memref<8x32xbf16, #tpu.memory_space<vmem>>, vector<8x32xbf16>
    %c0_3 = arith.constant 0 : index
    %c0_4 = arith.constant 0 : index
    %10 = vector.load %arg5[%c0_3, %c0_4] : memref<32x32xbf16, #tpu.memory_space<vmem>>, vector<32x32xbf16>
    %cst = arith.constant dense<0.000000e+00> : vector<8x32xf32>
    %11 = tpu.matmul %9, %10, %cst {dimension_numbers = #tpu.dot_dimension_numbers<[1], [0], [0], [1], [0, 0, 1, 1], [], []>} : vector<8x32xbf16>, vector<32x32xbf16>, vector<8x32xf32> -> vector<8x32xf32>
    %cst_5 = arith.constant 0.353553385 : f32
    %12 = vector.broadcast %cst_5 : f32 to vector<8x32xf32>
    %13 = arith.mulf %11, %12 : vector<8x32xf32>
    %14 = vector.extract_strided_slice %13 {offsets = [0, 0], sizes = [8, 8], strides = [1, 1]} : vector<8x32xf32> to vector<8x8xf32>
    %15 = arith.truncf %14 : vector<8x8xf32> to vector<8x8xbf16>
    %c0_6 = arith.constant 0 : index
    %c0_7 = arith.constant 0 : index
    %c0_8 = arith.constant 0 : index
    %16 = vector.load %arg19[%c0_6, %c0_7, %c0_8] : memref<4x8x8xbf16, #tpu.memory_space<vmem>>, vector<1x8x8xbf16>
    %17 = vector.shape_cast %16 : vector<1x8x8xbf16> to vector<8x8xbf16>
    %18 = vector.shape_cast %15 : vector<8x8xbf16> to vector<1x8x8xbf16>
    tpu.vector_store %arg19[%c0_6, %c0_7, %c0_8], %18 {strides = array<i32>} : memref<4x8x8xbf16, #tpu.memory_space<vmem>>, vector<1x8x8xbf16>,
    %19 = vector.extract_strided_slice %13 {offsets = [0, 8], sizes = [8, 8], strides = [1, 1]} : vector<8x32xf32> to vector<8x8xf32>
    %20 = arith.truncf %19 : vector<8x8xf32> to vector<8x8xbf16>
    %c1 = arith.constant 1 : index
    %c0_9 = arith.constant 0 : index
    %c0_10 = arith.constant 0 : index
    %21 = vector.load %arg19[%c1, %c0_9, %c0_10] : memref<4x8x8xbf16, #tpu.memory_space<vmem>>, vector<1x8x8xbf16>
    %22 = vector.shape_cast %21 : vector<1x8x8xbf16> to vector<8x8xbf16>
    %23 = vector.shape_cast %20 : vector<8x8xbf16> to vector<1x8x8xbf16>
    tpu.vector_store %arg19[%c1, %c0_9, %c0_10], %23 {strides = array<i32>} : memref<4x8x8xbf16, #tpu.memory_space<vmem>>, vector<1x8x8xbf16>,
    %24 = vector.extract_strided_slice %13 {offsets = [0, 16], sizes = [8, 8], strides = [1, 1]} : vector<8x32xf32> to vector<8x8xf32>
    %25 = arith.truncf %24 : vector<8x8xf32> to vector<8x8xbf16>
    %c2 = arith.constant 2 : index
    %c0_11 = arith.constant 0 : index
    %c0_12 = arith.constant 0 : index
    %26 = vector.load %arg19[%c2, %c0_11, %c0_12] : memref<4x8x8xbf16, #tpu.memory_space<vmem>>, vector<1x8x8xbf16>
    %27 = vector.shape_cast %26 : vector<1x8x8xbf16> to vector<8x8xbf16>
    %28 = vector.shape_cast %25 : vector<8x8xbf16> to vector<1x8x8xbf16>
    tpu.vector_store %arg19[%c2, %c0_11, %c0_12], %28 {strides = array<i32>} : memref<4x8x8xbf16, #tpu.memory_space<vmem>>, vector<1x8x8xbf16>,
    %29 = vector.extract_strided_slice %13 {offsets = [0, 24], sizes = [8, 8], strides = [1, 1]} : vector<8x32xf32> to vector<8x8xf32>
    %30 = arith.truncf %29 : vector<8x8xf32> to vector<8x8xbf16>
    %c3 = arith.constant 3 : index
    %c0_13 = arith.constant 0 : index
    %c0_14 = arith.constant 0 : index
    %31 = vector.load %arg19[%c3, %c0_13, %c0_14] : memref<4x8x8xbf16, #tpu.memory_space<vmem>>, vector<1x8x8xbf16>
    %32 = vector.shape_cast %31 : vector<1x8x8xbf16> to vector<8x8xbf16>
    %33 = vector.shape_cast %30 : vector<8x8xbf16> to vector<1x8x8xbf16>
    tpu.vector_store %arg19[%c3, %c0_13, %c0_14], %33 {strides = array<i32>} : memref<4x8x8xbf16, #tpu.memory_space<vmem>>, vector<1x8x8xbf16>,
    %c0_15 = arith.constant 0 : index
    %c0_16 = arith.constant 0 : index
    %c0_17 = arith.constant 0 : index
    %34 = vector.load %arg19[%c0_15, %c0_16, %c0_17] : memref<4x8x8xbf16, #tpu.memory_space<vmem>>, vector<4x8x8xbf16>
    %c0_18 = arith.constant 0 : index
    %c0_19 = arith.constant 0 : index
    %c0_20 = arith.constant 0 : index
    %35 = vector.load %arg17[%c0_18, %c0_19, %c0_20] : memref<4x8x8xbf16, #tpu.memory_space<vmem>>, vector<4x8x8xbf16>
    "tpu.trace_start"() <{level = 10 : i32, message = "hqd,hkd->hqk"}> : () -> ()
    %cst_21 = arith.constant dense<0.000000e+00> : vector<4x8x8xf32>
    %36 = tpu.matmul %34, %35, %cst_21 {dimension_numbers = #tpu.dot_dimension_numbers<[2], [2], [1], [1], [0, 0, 0, 1, 1, 1], [0], [0]>} : vector<4x8x8xbf16>, vector<4x8x8xbf16>, vector<4x8x8xf32> -> vector<4x8x8xf32>
    "tpu.trace_stop"() : () -> ()
    %cst_22 = arith.constant dense<0xFF800000> : vector<4x8xf32>
    %37 = vector.multi_reduction <maximumf>, %36, %cst_22 [2] : vector<4x8x8xf32> to vector<4x8xf32>
    %38 = vector.shape_cast %37 : vector<4x8xf32> to vector<4x8x1xf32>
    %39 = vector.broadcast %38 : vector<4x8x1xf32> to vector<4x8x8xf32>
    %40 = arith.subf %36, %39 : vector<4x8x8xf32>
    %41 = math.exp %40 : vector<4x8x8xf32>
    %cst_23 = arith.constant dense<0.000000e+00> : vector<4x8xf32>
    %42 = vector.multi_reduction <add>, %41, %cst_23 [2] : vector<4x8x8xf32> to vector<4x8xf32>
    %43 = vector.shape_cast %42 : vector<4x8xf32> to vector<4x8x1xf32>
    %44 = tpu.reciprocal %43 {approx = true} : vector<4x8x1xf32> -> vector<4x8x1xf32>
    %45 = vector.broadcast %44 : vector<4x8x1xf32> to vector<4x8x8xf32>
    %46 = arith.mulf %41, %45 : vector<4x8x8xf32>
    %47 = arith.truncf %46 : vector<4x8x8xf32> to vector<4x8x8xbf16>
    %c0_24 = arith.constant 0 : index
    %c0_25 = arith.constant 0 : index
    %c0_26 = arith.constant 0 : index
    %48 = vector.load %arg18[%c0_24, %c0_25, %c0_26] : memref<4x8x8xbf16, #tpu.memory_space<vmem>>, vector<4x8x8xbf16>
    "tpu.trace_start"() <{level = 10 : i32, message = "hqk,hkd->hqd"}> : () -> ()
    %cst_27 = arith.constant dense<0.000000e+00> : vector<4x8x8xf32>
    %49 = tpu.matmul %47, %48, %cst_27 {dimension_numbers = #tpu.dot_dimension_numbers<[2], [1], [1], [2], [0, 0, 0, 1, 1, 2], [0], [0]>} : vector<4x8x8xbf16>, vector<4x8x8xbf16>, vector<4x8x8xf32> -> vector<4x8x8xf32>
    "tpu.trace_stop"() : () -> ()
    %50 = vector.extract_strided_slice %49 {offsets = [0, 0, 0], sizes = [1, 8, 8], strides = [1, 1, 1]} : vector<4x8x8xf32> to vector<1x8x8xf32>
    %51 = vector.shape_cast %50 : vector<1x8x8xf32> to vector<8x8xf32>
    %52 = arith.truncf %51 : vector<8x8xf32> to vector<8x8xbf16>
    %c0_28 = arith.constant 0 : index
    %c0_29 = arith.constant 0 : index
    %53 = vector.load %arg20[%c0_28, %c0_29] : memref<8x32xbf16, #tpu.memory_space<vmem>>, vector<8x8xbf16>
    tpu.vector_store %arg20[%c0_28, %c0_29], %52 {strides = array<i32>} : memref<8x32xbf16, #tpu.memory_space<vmem>>, vector<8x8xbf16>,
    %54 = vector.extract_strided_slice %49 {offsets = [1, 0, 0], sizes = [1, 8, 8], strides = [1, 1, 1]} : vector<4x8x8xf32> to vector<1x8x8xf32>
    %55 = vector.shape_cast %54 : vector<1x8x8xf32> to vector<8x8xf32>
    %56 = arith.truncf %55 : vector<8x8xf32> to vector<8x8xbf16>
    %c0_30 = arith.constant 0 : index
    %c8 = arith.constant 8 : index
    %57 = vector.load %arg20[%c0_30, %c8] : memref<8x32xbf16, #tpu.memory_space<vmem>>, vector<8x8xbf16>
    tpu.vector_store %arg20[%c0_30, %c8], %56 {strides = array<i32>} : memref<8x32xbf16, #tpu.memory_space<vmem>>, vector<8x8xbf16>,
    %58 = vector.extract_strided_slice %49 {offsets = [2, 0, 0], sizes = [1, 8, 8], strides = [1, 1, 1]} : vector<4x8x8xf32> to vector<1x8x8xf32>
    %59 = vector.shape_cast %58 : vector<1x8x8xf32> to vector<8x8xf32>
    %60 = arith.truncf %59 : vector<8x8xf32> to vector<8x8xbf16>
    %c0_31 = arith.constant 0 : index
    %c16 = arith.constant 16 : index
    %61 = vector.load %arg20[%c0_31, %c16] : memref<8x32xbf16, #tpu.memory_space<vmem>>, vector<8x8xbf16>
    tpu.vector_store %arg20[%c0_31, %c16], %60 {strides = array<i32>} : memref<8x32xbf16, #tpu.memory_space<vmem>>, vector<8x8xbf16>,
    %62 = vector.extract_strided_slice %49 {offsets = [3, 0, 0], sizes = [1, 8, 8], strides = [1, 1, 1]} : vector<4x8x8xf32> to vector<1x8x8xf32>
    %63 = vector.shape_cast %62 : vector<1x8x8xf32> to vector<8x8xf32>
    %64 = arith.truncf %63 : vector<8x8xf32> to vector<8x8xbf16>
    %c0_32 = arith.constant 0 : index
    %c24 = arith.constant 24 : index
    %65 = vector.load %arg20[%c0_32, %c24] : memref<8x32xbf16, #tpu.memory_space<vmem>>, vector<8x8xbf16>
    tpu.vector_store %arg20[%c0_32, %c24], %64 {strides = array<i32>} : memref<8x32xbf16, #tpu.memory_space<vmem>>, vector<8x8xbf16>,
    %c0_33 = arith.constant 0 : index
    %c0_34 = arith.constant 0 : index
    %66 = vector.load %arg20[%c0_33, %c0_34] : memref<8x32xbf16, #tpu.memory_space<vmem>>, vector<8x32xbf16>
    %c0_35 = arith.constant 0 : index
    %c0_36 = arith.constant 0 : index
    %67 = vector.load %arg7[%c0_35, %c0_36] : memref<32x32xbf16, #tpu.memory_space<vmem>>, vector<32x32xbf16>
    %cst_37 = arith.constant dense<0.000000e+00> : vector<8x32xf32>
    %68 = tpu.matmul %66, %67, %cst_37 {dimension_numbers = #tpu.dot_dimension_numbers<[1], [0], [0], [1], [0, 0, 1, 1], [], []>} : vector<8x32xbf16>, vector<32x32xbf16>, vector<8x32xf32> -> vector<8x32xf32>
    %c0_38 = arith.constant 0 : index
    %c0_39 = arith.constant 0 : index
    %69 = vector.load %arg8[%c0_38, %c0_39] : memref<1x32xf32, #tpu.memory_space<vmem>>, vector<1x32xf32>
    %70 = vector.shape_cast %69 : vector<1x32xf32> to vector<32xf32>
    %71 = vector.shape_cast %70 : vector<32xf32> to vector<1x32xf32>
    %72 = vector.broadcast %71 : vector<1x32xf32> to vector<8x32xf32>
    %73 = arith.addf %68, %72 : vector<8x32xf32>
    %74 = arith.addf %7, %73 : vector<8x32xf32>
    %c0_40 = arith.constant 0 : index
    %c0_41 = arith.constant 0 : index
    %75 = vector.load %arg9[%c0_40, %c0_41] : memref<1x32xf32, #tpu.memory_space<vmem>>, vector<1x32xf32>
    %76 = vector.shape_cast %75 : vector<1x32xf32> to vector<32xf32>
    %c0_42 = arith.constant 0 : index
    %c0_43 = arith.constant 0 : index
    %77 = vector.load %arg10[%c0_42, %c0_43] : memref<1x32xf32, #tpu.memory_space<vmem>>, vector<1x32xf32>
    %78 = vector.shape_cast %77 : vector<1x32xf32> to vector<32xf32>
    %cst_44 = arith.constant dense<0.000000e+00> : vector<8xf32>
    %79 = vector.multi_reduction <add>, %74, %cst_44 [1] : vector<8x32xf32> to vector<8xf32>
    %80 = vector.shape_cast %79 : vector<8xf32> to vector<8x1xf32>
    %cst_45 = arith.constant 3.200000e+01 : f32
    %81 = vector.broadcast %cst_45 : f32 to vector<8x1xf32>
    %82 = arith.divf %80, %81 : vector<8x1xf32>
    %83 = vector.broadcast %82 : vector<8x1xf32> to vector<8x32xf32>
    %84 = arith.subf %74, %83 : vector<8x32xf32>
    %85 = arith.mulf %84, %84 : vector<8x32xf32>
    %cst_46 = arith.constant dense<0.000000e+00> : vector<8xf32>
    %86 = vector.multi_reduction <add>, %85, %cst_46 [1] : vector<8x32xf32> to vector<8xf32>
    %87 = vector.shape_cast %86 : vector<8xf32> to vector<8x1xf32>
    %cst_47 = arith.constant 3.200000e+01 : f32
    %88 = vector.broadcast %cst_47 : f32 to vector<8x1xf32>
    %89 = arith.divf %87, %88 : vector<8x1xf32>
    %90 = vector.broadcast %82 : vector<8x1xf32> to vector<8x32xf32>
    %91 = arith.subf %74, %90 : vector<8x32xf32>
    %cst_48 = arith.constant 9.99999974E-6 : f32
    %92 = vector.broadcast %cst_48 : f32 to vector<8x1xf32>
    %93 = arith.addf %89, %92 : vector<8x1xf32>
    %94 = math.rsqrt %93 : vector<8x1xf32>
    %95 = vector.broadcast %94 : vector<8x1xf32> to vector<8x32xf32>
    %96 = arith.mulf %91, %95 : vector<8x32xf32>
    %97 = vector.shape_cast %76 : vector<32xf32> to vector<1x32xf32>
    %98 = vector.broadcast %97 : vector<1x32xf32> to vector<8x32xf32>
    %99 = arith.mulf %96, %98 : vector<8x32xf32>
    %100 = vector.shape_cast %78 : vector<32xf32> to vector<1x32xf32>
    %101 = vector.broadcast %100 : vector<1x32xf32> to vector<8x32xf32>
    %102 = arith.addf %99, %101 : vector<8x32xf32>
    %103 = arith.truncf %102 : vector<8x32xf32> to vector<8x32xbf16>
    %c0_49 = arith.constant 0 : index
    %c0_50 = arith.constant 0 : index
    %104 = vector.load %arg11[%c0_49, %c0_50] : memref<32x128xbf16, #tpu.memory_space<vmem>>, vector<32x128xbf16>
    %cst_51 = arith.constant dense<0.000000e+00> : vector<8x128xf32>
    %105 = tpu.matmul %103, %104, %cst_51 {dimension_numbers = #tpu.dot_dimension_numbers<[1], [0], [0], [1], [0, 0, 1, 1], [], []>} : vector<8x32xbf16>, vector<32x128xbf16>, vector<8x128xf32> -> vector<8x128xf32>
    %c0_52 = arith.constant 0 : index
    %c0_53 = arith.constant 0 : index
    %106 = vector.load %arg12[%c0_52, %c0_53] : memref<1x128xf32, #tpu.memory_space<vmem>>, vector<1x128xf32>
    %107 = vector.shape_cast %106 : vector<1x128xf32> to vector<128xf32>
    %108 = vector.shape_cast %107 : vector<128xf32> to vector<1x128xf32>
    %109 = vector.broadcast %108 : vector<1x128xf32> to vector<8x128xf32>
    %110 = arith.addf %105, %109 : vector<8x128xf32>
    %cst_54 = arith.constant 5.000000e-01 : f32
    %111 = vector.broadcast %cst_54 : f32 to vector<8x128xf32>
    %112 = arith.mulf %111, %110 : vector<8x128xf32>
    %cst_55 = arith.constant 0.707106769 : f32
    %113 = vector.broadcast %cst_55 : f32 to vector<8x128xf32>
    %114 = arith.mulf %110, %113 : vector<8x128xf32>
    %115 = math.erf %114 : vector<8x128xf32>
    %cst_56 = arith.constant 1.000000e+00 : f32
    %116 = vector.broadcast %cst_56 : f32 to vector<8x128xf32>
    %117 = arith.addf %116, %115 : vector<8x128xf32>
    %118 = arith.mulf %112, %117 : vector<8x128xf32>
    %119 = arith.truncf %118 : vector<8x128xf32> to vector<8x128xbf16>
    %c0_57 = arith.constant 0 : index
    %c0_58 = arith.constant 0 : index
    %120 = vector.load %arg13[%c0_57, %c0_58] : memref<128x32xbf16, #tpu.memory_space<vmem>>, vector<128x32xbf16>
    %cst_59 = arith.constant dense<0.000000e+00> : vector<8x32xf32>
    %121 = tpu.matmul %119, %120, %cst_59 {dimension_numbers = #tpu.dot_dimension_numbers<[1], [0], [0], [1], [0, 0, 1, 1], [], []>} : vector<8x128xbf16>, vector<128x32xbf16>, vector<8x32xf32> -> vector<8x32xf32>
    %c0_60 = arith.constant 0 : index
    %c0_61 = arith.constant 0 : index
    %122 = vector.load %arg14[%c0_60, %c0_61] : memref<1x32xf32, #tpu.memory_space<vmem>>, vector<1x32xf32>
    %123 = vector.shape_cast %122 : vector<1x32xf32> to vector<32xf32>
    %124 = vector.shape_cast %123 : vector<32xf32> to vector<1x32xf32>
    %125 = vector.broadcast %124 : vector<1x32xf32> to vector<8x32xf32>
    %126 = arith.addf %121, %125 : vector<8x32xf32>
    %127 = arith.addf %74, %126 : vector<8x32xf32>
    %c0_62 = arith.constant 0 : index
    %c0_63 = arith.constant 0 : index
    %c0_64 = arith.constant 0 : index
    %128 = vector.load %arg15[%c0_62, %c0_63, %c0_64] : memref<1x8x32xf32, #tpu.memory_space<vmem>>, vector<1x8x32xf32>
    %129 = vector.shape_cast %128 : vector<1x8x32xf32> to vector<8x32xf32>
    %130 = vector.shape_cast %127 : vector<8x32xf32> to vector<1x8x32xf32>
    tpu.vector_store %arg15[%c0_62, %c0_63, %c0_64], %130 {strides = array<i32>} : memref<1x8x32xf32, #tpu.memory_space<vmem>>, vector<1x8x32xf32>,
    return
  }
  func.func @transform_0(%arg0: i32, %arg1: i32) -> (i32, i32, i32) {
    %c0_i32 = arith.constant 0 : i32
    %c0_i32_0 = arith.constant 0 : i32
    %c0_i32_1 = arith.constant 0 : i32
    return %arg0, %c0_i32, %c0_i32_0 : i32, i32, i32
  }
  func.func @transform_1(%arg0: i32, %arg1: i32) -> (i32, i32) {
    %c0_i32 = arith.constant 0 : i32
    %c0_i32_0 = arith.constant 0 : i32
    %c0_i32_1 = arith.constant 0 : i32
    return %c0_i32, %c0_i32_0 : i32, i32
  }
  func.func @transform_2(%arg0: i32, %arg1: i32) -> (i32, i32) {
    %c0_i32 = arith.constant 0 : i32
    %c0_i32_0 = arith.constant 0 : i32
    %c0_i32_1 = arith.constant 0 : i32
    return %c0_i32, %c0_i32_0 : i32, i32
  }
  func.func @transform_3(%arg0: i32, %arg1: i32) -> (i32, i32) {
    %c0_i32 = arith.constant 0 : i32
    %c0_i32_0 = arith.constant 0 : i32
    %c0_i32_1 = arith.constant 0 : i32
    return %c0_i32, %c0_i32_0 : i32, i32
  }
  func.func @transform_4(%arg0: i32, %arg1: i32) -> (i32, i32) {
    %c0_i32 = arith.constant 0 : i32
    %c0_i32_0 = arith.constant 0 : i32
    %c0_i32_1 = arith.constant 0 : i32
    return %c0_i32, %c0_i32_0 : i32, i32
  }
  func.func @transform_5(%arg0: i32, %arg1: i32) -> (i32, i32) {
    %c0_i32 = arith.constant 0 : i32
    %c0_i32_0 = arith.constant 0 : i32
    %c0_i32_1 = arith.constant 0 : i32
    return %c0_i32, %c0_i32_0 : i32, i32
  }
  func.func @transform_6(%arg0: i32, %arg1: i32) -> (i32, i32) {
    %c0_i32 = arith.constant 0 : i32
    %c0_i32_0 = arith.constant 0 : i32
    %c0_i32_1 = arith.constant 0 : i32
    return %c0_i32, %c0_i32_0 : i32, i32
  }
  func.func @transform_7(%arg0: i32, %arg1: i32) -> (i32, i32) {
    %c0_i32 = arith.constant 0 : i32
    %c0_i32_0 = arith.constant 0 : i32
    %c0_i32_1 = arith.constant 0 : i32
    return %c0_i32, %c0_i32_0 : i32, i32
  }
  func.func @transform_8(%arg0: i32, %arg1: i32) -> (i32, i32) {
    %c0_i32 = arith.constant 0 : i32
    %c0_i32_0 = arith.constant 0 : i32
    %c0_i32_1 = arith.constant 0 : i32
    return %c0_i32, %c0_i32_0 : i32, i32
  }
  func.func @transform_9(%arg0: i32, %arg1: i32) -> (i32, i32) {
    %c0_i32 = arith.constant 0 : i32
    %c0_i32_0 = arith.constant 0 : i32
    %c0_i32_1 = arith.constant 0 : i32
    return %c0_i32, %c0_i32_0 : i32, i32
  }
  func.func @transform_10(%arg0: i32, %arg1: i32) -> (i32, i32) {
    %c0_i32 = arith.constant 0 : i32
    %c0_i32_0 = arith.constant 0 : i32
    %c0_i32_1 = arith.constant 0 : i32
    return %c0_i32, %c0_i32_0 : i32, i32
  }
  func.func @transform_11(%arg0: i32, %arg1: i32) -> (i32, i32) {
    %c0_i32 = arith.constant 0 : i32
    %c0_i32_0 = arith.constant 0 : i32
    %c0_i32_1 = arith.constant 0 : i32
    return %c0_i32, %c0_i32_0 : i32, i32
  }
  func.func @transform_12(%arg0: i32, %arg1: i32) -> (i32, i32) {
    %c0_i32 = arith.constant 0 : i32
    %c0_i32_0 = arith.constant 0 : i32
    %c0_i32_1 = arith.constant 0 : i32
    return %c0_i32, %c0_i32_0 : i32, i32
  }
  func.func @transform_13(%arg0: i32, %arg1: i32) -> (i32, i32, i32) {
    %c0_i32 = arith.constant 0 : i32
    %c0_i32_0 = arith.constant 0 : i32
    return %arg0, %arg1, %c0_i32 : i32, i32, i32
  }
}

</mosaic_0001>

<llo_original>
// kernel: tpu_custom_call.1
$region0: #{tpu_custom_call.1}
  #allocation0 [shape = 'u32[]', space=smem, size = 0x4, offset = 0x4, fixed_abs, tag = 'smem constant byte address 0x4 - core index']
  #allocation1 [shape = 'u32[144,128]{1,0:T(1,128)}', space=vmem, size = 0x12000, scoped, tag = 'internal scratch']
  #allocation2 [shape = 'bf16[8,32]{1,0:T(8,128)(2,1)}', space=vmem, size = 0x800, scoped, tag = 'scratch operand']
  #allocation3 [shape = 'bf16[4,8,8]{2,1,0:T(8,128)(2,1)}', space=vmem, size = 0x2000, scoped, tag = 'scratch operand']
  #allocation4 [shape = 'bf16[4,8,8]{2,1,0:T(8,128)(2,1)}', space=vmem, size = 0x2000, scoped, tag = 'scratch operand']
  #allocation5 [shape = 'bf16[4,8,8]{2,1,0:T(8,128)(2,1)}', space=vmem, size = 0x2000, scoped, tag = 'scratch operand']
  #allocation6 [shape = 'bf16[8,32]{1,0:T(8,128)(2,1)}', space=vmem, size = 0x800, scoped, tag = 'scratch operand']
  %s0 = inlined_call_operand.vmem [shape: f32[2,8,32], index: 0, kind: input, shape index: {}]
  %s1 = inlined_call_operand.vmem [shape: f32[1,32], index: 1, kind: input, shape index: {}]
  %s2 = inlined_call_operand.vmem [shape: f32[1,32], index: 2, kind: input, shape index: {}]
  %s3 = inlined_call_operand.vmem [shape: bf16[32,32], index: 3, kind: input, shape index: {}]
  %s4 = inlined_call_operand.vmem [shape: bf16[32,64], index: 4, kind: input, shape index: {}]
  %s5 = inlined_call_operand.vmem [shape: bf16[32,32], index: 5, kind: input, shape index: {}]
  %s6 = inlined_call_operand.vmem [shape: f32[1,32], index: 6, kind: input, shape index: {}]
  %s7 = inlined_call_operand.vmem [shape: f32[1,32], index: 7, kind: input, shape index: {}]
  %s8 = inlined_call_operand.hbm [shape: f32[1,32], index: 8, kind: input, shape index: {}]
  %s9 = inlined_call_operand.vmem [shape: bf16[32,128], index: 9, kind: input, shape index: {}]
  %s10 = inlined_call_operand.hbm [shape: f32[1,128], index: 10, kind: input, shape index: {}]
  %s11 = inlined_call_operand.vmem [shape: bf16[128,32], index: 11, kind: input, shape index: {}]
  %s12 = inlined_call_operand.vmem [shape: f32[1,32], index: 12, kind: input, shape index: {}]
  %s13 = inlined_call_operand.hbm [shape: f32[2,8,32], index: 13, kind: output, shape index: {}]
  %s14 = sld [smem:[#allocation0]]
  $region97: #{tpu_custom_call.1} parent=0
    _
  %s16 = ssub.s32 1, %s14
  %s17 = scalar_select 0, %s16, %s14
  $region1: #{tpu_custom_call.1} parent=0
    #allocation7 [shape = 'u8[512]{0}', space=vmem, size = 0x400, scoped, tag = 'input window, operand 8, single buffered']
    #allocation8 [shape = 's32[2]{0}', space=sflag, size = 0x8, scoped, tag = 'scoped memory for tpu_custom_call.1']
    #allocation9 [shape = 's32[2]{0}', space=sflag, size = 0x8, scoped, tag = 'scoped memory for tpu_custom_call.1']
    #allocation10 [shape = 'u8[512]{0}', space=vmem, size = 0x400, scoped, tag = 'input window, operand 10, single buffered']
    #allocation11 [shape = 's32[1]{0}', space=sflag, size = 0x4, scoped, tag = 'scoped memory for tpu_custom_call.1']
    #allocation12 [shape = 'u8[8192]{0}', space=vmem, size = 0x2000, scoped, tag = 'output window, operand 0']
    %18 = vsyncpa [#allocation8], 0
    %19 = vsyncpa [#allocation11], 0
    %20 = vsyncpa [#allocation9], 0
    %s21 = scalar_lea.sflag [#allocation9], 1
    %22 = vsyncpa %s21, 0
    loop: start=0, step=1, limit=4
    $region2: #{tpu_custom_call.1} parent=1 // loop_pre_header
      _
    $region3: #{tpu_custom_call.1} parent=1 // loop_header
      %s24 = sphi 0, %s28
      %p25 = scmp.ge.s32.totalorder %s24, 4
      %s31 = sphi 0, %s43
      %s32 = sphi 0, %s39
      %s33 = sphi 0, %s31
      %s34 = sphi 0, %s32
      %s35 = sphi 0, %s33
      %s36 = sphi 0, %s34
      %s46 = sphi 0, %s48
      %s49 = sphi 0, %s46
      %s50 = sphi 0, %s49
      %s66 = sphi 0, %s50
      %s70 = sphi 0, %s70
      %s72 = sphi 0, %s70
      %s73 = sphi 0, %s72
      %s87 = sphi 0, %s73
      %s91 = sphi 0, %s91
      %s93 = sphi 0, %s91
      %s94 = sphi 0, %s93
      %s108 = sphi 0, %s94
      %s112 = sphi 0, %s112
      %s114 = sphi 0, %s112
      %s115 = sphi 0, %s114
      %s129 = sphi 0, %s115
      %s133 = sphi 0, %s133
      %s135 = sphi 0, %s133
      %s136 = sphi 0, %s135
      %s150 = sphi 0, %s136
      %s154 = sphi 0, %s154
      %s156 = sphi 0, %s154
      %s157 = sphi 0, %s156
      %s171 = sphi 0, %s157
      %s175 = sphi 0, %s175
      %s177 = sphi 0, %s175
      %s178 = sphi 0, %s177
      %s192 = sphi 0, %s178
      %s196 = sphi 0, %s196
      %s198 = sphi 0, %s196
      %s199 = sphi 0, %s198
      %s213 = sphi 0, %s199
      %s217 = sphi 0, %s217
      %s219 = sphi 0, %s217
      %s220 = sphi 0, %s219
      %s234 = sphi 0, %s220
      %s238 = sphi 0, %s238
      %s240 = sphi 0, %s238
      %s241 = sphi 0, %s240
      %s255 = sphi 0, %s241
      %s259 = sphi 0, %s259
      %s261 = sphi 0, %s259
      %s262 = sphi 0, %s261
      %s276 = sphi 0, %s262
      %s280 = sphi 0, %s280
      %s282 = sphi 0, %s280
      %s283 = sphi 0, %s282
      %s297 = sphi 0, %s283
      %s301 = sphi 0, %s301
      %s303 = sphi 0, %s301
      %s304 = sphi 0, %s303
      %s318 = sphi 0, %s304
      %s326 = sphi 0, %s328
      %s329 = sphi 0, %s326
      %s330 = sphi 0, %s329
      %s346 = sphi 0, %s330
    $region4: #{tpu_custom_call.1} parent=1 // loop_header_branch
      %27 = sbr.rel (%p25) target = $region8
    $region5: #{tpu_custom_call.1} parent=1 // loop_body
      %s29 = ssub.s32 %s24, 1
      %s30 = ssub.s32 %s24, 2
      %s37 = sadd.s32 1, %s32
      %p38 = scmp.ge.s32.totalorder %s37, 1
      %s39 = scalar_select %p38, 0, %s37
      %s40 = sadd.s32 1, %s31
      %s41 = scalar_select %p38, %s40, %s31
      %p42 = scmp.ge.s32.totalorder %s41, 2
      %s43 = scalar_select %p42, 0, %s41
      %s44 = ssub.s32 %s31, %s43
      %p45 = scmp.eq.s32.totalorder %s44, 0
      %s47 = sadd.s32 %s46, 1
      %s48 = scalar_select %p45, %s46, %s47
      %p51 = pneg %p45
      %p52 = scmp.eq.s32.totalorder %s24, 1
      %p53 = por %p51, %p52
      %p54 = scmp.ne.s32.totalorder %s46, %s49
      %p55 = scmp.eq.s32.totalorder %s24, 0
      %p56 = por %p54, %p55
      %p57 = scmp.ne.s32.totalorder %s46, %s49
      %p58 = scmp.eq.s32.totalorder %s29, 1
      %p59 = por %p57, %p58
      %p60 = scmp.ne.s32.totalorder %s49, %s50
      %p61 = scmp.eq.s32.totalorder %s29, 0
      %p62 = por %p60, %p61
      %p63 = scmp.ne.s32.totalorder %s49, %s50
      %p64 = scmp.eq.s32.totalorder %s30, 1
      %p65 = por %p63, %p64
      %p67 = scmp.ne.s32.totalorder %s50, %s66
      %p68 = scmp.eq.s32.totalorder %s30, 0
      %p69 = por %p67, %p68
      %s71 = sadd.s32 %s70, 1
      %p74 = scmp.eq.s32.totalorder %s24, 1
      %p75 = scmp.ne.s32.totalorder %s70, %s72
      %p76 = scmp.eq.s32.totalorder %s24, 0
      %p77 = por %p75, %p76
      %p78 = scmp.ne.s32.totalorder %s70, %s72
      %p79 = scmp.eq.s32.totalorder %s29, 1
      %p80 = por %p78, %p79
      %p81 = scmp.ne.s32.totalorder %s72, %s73
      %p82 = scmp.eq.s32.totalorder %s29, 0
      %p83 = por %p81, %p82
      %p84 = scmp.ne.s32.totalorder %s72, %s73
      %p85 = scmp.eq.s32.totalorder %s30, 1
      %p86 = por %p84, %p85
      %p88 = scmp.ne.s32.totalorder %s73, %s87
      %p89 = scmp.eq.s32.totalorder %s30, 0
      %p90 = por %p88, %p89
      %s92 = sadd.s32 %s91, 1
      %p95 = scmp.eq.s32.totalorder %s24, 1
      %p96 = scmp.ne.s32.totalorder %s91, %s93
      %p97 = scmp.eq.s32.totalorder %s24, 0
      %p98 = por %p96, %p97
      %p99 = scmp.ne.s32.totalorder %s91, %s93
      %p100 = scmp.eq.s32.totalorder %s29, 1
      %p101 = por %p99, %p100
      %p102 = scmp.ne.s32.totalorder %s93, %s94
      %p103 = scmp.eq.s32.totalorder %s29, 0
      %p104 = por %p102, %p103
      %p105 = scmp.ne.s32.totalorder %s93, %s94
      %p106 = scmp.eq.s32.totalorder %s30, 1
      %p107 = por %p105, %p106
      %p109 = scmp.ne.s32.totalorder %s94, %s108
      %p110 = scmp.eq.s32.totalorder %s30, 0
      %p111 = por %p109, %p110
      %s113 = sadd.s32 %s112, 1
      %p116 = scmp.eq.s32.totalorder %s24, 1
      %p117 = scmp.ne.s32.totalorder %s112, %s114
      %p118 = scmp.eq.s32.totalorder %s24, 0
      %p119 = por %p117, %p118
      %p120 = scmp.ne.s32.totalorder %s112, %s114
      %p121 = scmp.eq.s32.totalorder %s29, 1
      %p122 = por %p120, %p121
      %p123 = scmp.ne.s32.totalorder %s114, %s115
      %p124 = scmp.eq.s32.totalorder %s29, 0
      %p125 = por %p123, %p124
      %p126 = scmp.ne.s32.totalorder %s114, %s115
      %p127 = scmp.eq.s32.totalorder %s30, 1
      %p128 = por %p126, %p127
      %p130 = scmp.ne.s32.totalorder %s115, %s129
      %p131 = scmp.eq.s32.totalorder %s30, 0
      %p132 = por %p130, %p131
      %s134 = sadd.s32 %s133, 1
      %p137 = scmp.eq.s32.totalorder %s24, 1
      %p138 = scmp.ne.s32.totalorder %s133, %s135
      %p139 = scmp.eq.s32.totalorder %s24, 0
      %p140 = por %p138, %p139
      %p141 = scmp.ne.s32.totalorder %s133, %s135
      %p142 = scmp.eq.s32.totalorder %s29, 1
      %p143 = por %p141, %p142
      %p144 = scmp.ne.s32.totalorder %s135, %s136
      %p145 = scmp.eq.s32.totalorder %s29, 0
      %p146 = por %p144, %p145
      %p147 = scmp.ne.s32.totalorder %s135, %s136
      %p148 = scmp.eq.s32.totalorder %s30, 1
      %p149 = por %p147, %p148
      %p151 = scmp.ne.s32.totalorder %s136, %s150
      %p152 = scmp.eq.s32.totalorder %s30, 0
      %p153 = por %p151, %p152
      %s155 = sadd.s32 %s154, 1
      %p158 = scmp.eq.s32.totalorder %s24, 1
      %p159 = scmp.ne.s32.totalorder %s154, %s156
      %p160 = scmp.eq.s32.totalorder %s24, 0
      %p161 = por %p159, %p160
      %p162 = scmp.ne.s32.totalorder %s154, %s156
      %p163 = scmp.eq.s32.totalorder %s29, 1
      %p164 = por %p162, %p163
      %p165 = scmp.ne.s32.totalorder %s156, %s157
      %p166 = scmp.eq.s32.totalorder %s29, 0
      %p167 = por %p165, %p166
      %p168 = scmp.ne.s32.totalorder %s156, %s157
      %p169 = scmp.eq.s32.totalorder %s30, 1
      %p170 = por %p168, %p169
      %p172 = scmp.ne.s32.totalorder %s157, %s171
      %p173 = scmp.eq.s32.totalorder %s30, 0
      %p174 = por %p172, %p173
      %s176 = sadd.s32 %s175, 1
      %p179 = scmp.eq.s32.totalorder %s24, 1
      %p180 = scmp.ne.s32.totalorder %s175, %s177
      %p181 = scmp.eq.s32.totalorder %s24, 0
      %p182 = por %p180, %p181
      %p183 = scmp.ne.s32.totalorder %s175, %s177
      %p184 = scmp.eq.s32.totalorder %s29, 1
      %p185 = por %p183, %p184
      %p186 = scmp.ne.s32.totalorder %s177, %s178
      %p187 = scmp.eq.s32.totalorder %s29, 0
      %p188 = por %p186, %p187
      %p189 = scmp.ne.s32.totalorder %s177, %s178
      %p190 = scmp.eq.s32.totalorder %s30, 1
      %p191 = por %p189, %p190
      %p193 = scmp.ne.s32.totalorder %s178, %s192
      %p194 = scmp.eq.s32.totalorder %s30, 0
      %p195 = por %p193, %p194
      %s197 = sadd.s32 %s196, 1
      %p200 = scmp.eq.s32.totalorder %s24, 1
      %p201 = scmp.ne.s32.totalorder %s196, %s198
      %p202 = scmp.eq.s32.totalorder %s24, 0
      %p203 = por %p201, %p202
      %p204 = scmp.ne.s32.totalorder %s196, %s198
      %p205 = scmp.eq.s32.totalorder %s29, 1
      %p206 = por %p204, %p205
      %p207 = scmp.ne.s32.totalorder %s198, %s199
      %p208 = scmp.eq.s32.totalorder %s29, 0
      %p209 = por %p207, %p208
      %p210 = scmp.ne.s32.totalorder %s198, %s199
      %p211 = scmp.eq.s32.totalorder %s30, 1
      %p212 = por %p210, %p211
      %p214 = scmp.ne.s32.totalorder %s199, %s213
      %p215 = scmp.eq.s32.totalorder %s30, 0
      %p216 = por %p214, %p215
      %s218 = sadd.s32 %s217, 1
      %p221 = scmp.eq.s32.totalorder %s24, 1
      %p222 = scmp.ne.s32.totalorder %s217, %s219
      %p223 = scmp.eq.s32.totalorder %s24, 0
      %p224 = por %p222, %p223
      %p225 = scmp.ne.s32.totalorder %s217, %s219
      %p226 = scmp.eq.s32.totalorder %s29, 1
      %p227 = por %p225, %p226
      %p228 = scmp.ne.s32.totalorder %s219, %s220
      %p229 = scmp.eq.s32.totalorder %s29, 0
      %p230 = por %p228, %p229
      %p231 = scmp.ne.s32.totalorder %s219, %s220
      %p232 = scmp.eq.s32.totalorder %s30, 1
      %p233 = por %p231, %p232
      %p235 = scmp.ne.s32.totalorder %s220, %s234
      %p236 = scmp.eq.s32.totalorder %s30, 0
      %p237 = por %p235, %p236
      %s239 = sadd.s32 %s238, 1
      %p242 = scmp.eq.s32.totalorder %s24, 1
      %p243 = scmp.ne.s32.totalorder %s238, %s240
      %p244 = scmp.eq.s32.totalorder %s24, 0
      %p245 = por %p243, %p244
      %p246 = scmp.ne.s32.totalorder %s238, %s240
      %p247 = scmp.eq.s32.totalorder %s29, 1
      %p248 = por %p246, %p247
      %p249 = scmp.ne.s32.totalorder %s240, %s241
      %p250 = scmp.eq.s32.totalorder %s29, 0
      %p251 = por %p249, %p250
      %p252 = scmp.ne.s32.totalorder %s240, %s241
      %p253 = scmp.eq.s32.totalorder %s30, 1
      %p254 = por %p252, %p253
      %p256 = scmp.ne.s32.totalorder %s241, %s255
      %p257 = scmp.eq.s32.totalorder %s30, 0
      %p258 = por %p256, %p257
      %s260 = sadd.s32 %s259, 1
      %p263 = scmp.eq.s32.totalorder %s24, 1
      %p264 = scmp.ne.s32.totalorder %s259, %s261
      %p265 = scmp.eq.s32.totalorder %s24, 0
      %p266 = por %p264, %p265
      %p267 = scmp.ne.s32.totalorder %s259, %s261
      %p268 = scmp.eq.s32.totalorder %s29, 1
      %p269 = por %p267, %p268
      %p270 = scmp.ne.s32.totalorder %s261, %s262
      %p271 = scmp.eq.s32.totalorder %s29, 0
      %p272 = por %p270, %p271
      %p273 = scmp.ne.s32.totalorder %s261, %s262
      %p274 = scmp.eq.s32.totalorder %s30, 1
      %p275 = por %p273, %p274
      %p277 = scmp.ne.s32.totalorder %s262, %s276
      %p278 = scmp.eq.s32.totalorder %s30, 0
      %p279 = por %p277, %p278
      %s281 = sadd.s32 %s280, 1
      %p284 = scmp.eq.s32.totalorder %s24, 1
      %p285 = scmp.ne.s32.totalorder %s280, %s282
      %p286 = scmp.eq.s32.totalorder %s24, 0
      %p287 = por %p285, %p286
      %p288 = scmp.ne.s32.totalorder %s280, %s282
      %p289 = scmp.eq.s32.totalorder %s29, 1
      %p290 = por %p288, %p289
      %p291 = scmp.ne.s32.totalorder %s282, %s283
      %p292 = scmp.eq.s32.totalorder %s29, 0
      %p293 = por %p291, %p292
      %p294 = scmp.ne.s32.totalorder %s282, %s283
      %p295 = scmp.eq.s32.totalorder %s30, 1
      %p296 = por %p294, %p295
      %p298 = scmp.ne.s32.totalorder %s283, %s297
      %p299 = scmp.eq.s32.totalorder %s30, 0
      %p300 = por %p298, %p299
      %s302 = sadd.s32 %s301, 1
      %p305 = scmp.eq.s32.totalorder %s24, 1
      %p306 = scmp.ne.s32.totalorder %s301, %s303
      %p307 = scmp.eq.s32.totalorder %s24, 0
      %p308 = por %p306, %p307
      %p309 = scmp.ne.s32.totalorder %s301, %s303
      %p310 = scmp.eq.s32.totalorder %s29, 1
      %p311 = por %p309, %p310
      %p312 = scmp.ne.s32.totalorder %s303, %s304
      %p313 = scmp.eq.s32.totalorder %s29, 0
      %p314 = por %p312, %p313
      %p315 = scmp.ne.s32.totalorder %s303, %s304
      %p316 = scmp.eq.s32.totalorder %s30, 1
      %p317 = por %p315, %p316
      %p319 = scmp.ne.s32.totalorder %s304, %s318
      %p320 = scmp.eq.s32.totalorder %s30, 0
      %p321 = por %p319, %p320
      %s322 = ssub.s32 %s31, %s43
      %s323 = ssub.s32 %s32, %s39
      %s324 = sor.u32 %s322, %s323
      %p325 = scmp.eq.s32.totalorder %s324, 0
      %s327 = sadd.s32 %s326, 1
      %s328 = scalar_select %p325, %s326, %s327
      %p331 = pneg %p325
      %p332 = scmp.eq.s32.totalorder %s24, 1
      %p333 = por %p331, %p332
      %p334 = scmp.ne.s32.totalorder %s326, %s329
      %p335 = scmp.eq.s32.totalorder %s24, 0
      %p336 = por %p334, %p335
      %p337 = scmp.ne.s32.totalorder %s326, %s329
      %p338 = scmp.eq.s32.totalorder %s29, 1
      %p339 = por %p337, %p338
      %p340 = scmp.ne.s32.totalorder %s329, %s330
      %p341 = scmp.eq.s32.totalorder %s29, 0
      %p342 = por %p340, %p341
      %p343 = scmp.ne.s32.totalorder %s329, %s330
      %p344 = scmp.eq.s32.totalorder %s30, 1
      %p345 = por %p343, %p344
      %p347 = scmp.ne.s32.totalorder %s330, %s346
      %p348 = scmp.eq.s32.totalorder %s30, 0
      %p349 = por %p347, %p348
      %p350 = scmp.le.s32.totalorder 1, %s24
      %p351 = scmp.lt.s32.totalorder %s24, 3
      %p352 = pnand %p350, %p351
      %p353 = pneg %p352
      // Predicated region
      $region9: #{tpu_custom_call.1} parent=5 // pred_check
        _
      $region10: #{tpu_custom_call.1} parent=5 // pred_check_branch
        %355 = sbr.rel (%p352) target = $region12
      $region11: #{tpu_custom_call.1} parent=5 // pred_region
        %s356 = ssub.s32 %s24, 1
        // Predicated region
        $region13: #{tpu_custom_call.1} parent=11 // pred_check
          %p357 = pneg %p83
        $region14: #{tpu_custom_call.1} parent=11 // pred_check_branch
          %359 = sbr.rel (%p357) target = $region16
        $region15: #{tpu_custom_call.1} parent=11 // pred_region
          _
        $region16: #{tpu_custom_call.1} parent=11 // pred_fallthru
          _
        // Predicated region
        $region17: #{tpu_custom_call.1} parent=11 // pred_check
          %p360 = pneg %p104
        $region18: #{tpu_custom_call.1} parent=11 // pred_check_branch
          %362 = sbr.rel (%p360) target = $region20
        $region19: #{tpu_custom_call.1} parent=11 // pred_region
          _
        $region20: #{tpu_custom_call.1} parent=11 // pred_fallthru
          _
        // Predicated region
        $region21: #{tpu_custom_call.1} parent=11 // pred_check
          %p363 = pneg %p125
        $region22: #{tpu_custom_call.1} parent=11 // pred_check_branch
          %365 = sbr.rel (%p363) target = $region24
        $region23: #{tpu_custom_call.1} parent=11 // pred_region
          _
        $region24: #{tpu_custom_call.1} parent=11 // pred_fallthru
          _
        // Predicated region
        $region25: #{tpu_custom_call.1} parent=11 // pred_check
          %p366 = pneg %p146
        $region26: #{tpu_custom_call.1} parent=11 // pred_check_branch
          %368 = sbr.rel (%p366) target = $region28
        $region27: #{tpu_custom_call.1} parent=11 // pred_region
          _
        $region28: #{tpu_custom_call.1} parent=11 // pred_fallthru
          _
        // Predicated region
        $region29: #{tpu_custom_call.1} parent=11 // pred_check
          %p369 = pneg %p167
        $region30: #{tpu_custom_call.1} parent=11 // pred_check_branch
          %371 = sbr.rel (%p369) target = $region32
        $region31: #{tpu_custom_call.1} parent=11 // pred_region
          _
        $region32: #{tpu_custom_call.1} parent=11 // pred_fallthru
          _
        // Predicated region
        $region33: #{tpu_custom_call.1} parent=11 // pred_check
          %p372 = pneg %p188
        $region34: #{tpu_custom_call.1} parent=11 // pred_check_branch
          %374 = sbr.rel (%p372) target = $region36
        $region35: #{tpu_custom_call.1} parent=11 // pred_region
          _
        $region36: #{tpu_custom_call.1} parent=11 // pred_fallthru
          _
        // Predicated region
        $region37: #{tpu_custom_call.1} parent=11 // pred_check
          %p375 = pneg %p209
        $region38: #{tpu_custom_call.1} parent=11 // pred_check_branch
          %377 = sbr.rel (%p375) target = $region40
        $region39: #{tpu_custom_call.1} parent=11 // pred_region
          _
        $region40: #{tpu_custom_call.1} parent=11 // pred_fallthru
          _
        // Predicated region
        $region41: #{tpu_custom_call.1} parent=11 // pred_check
          %p378 = pneg %p230
        $region42: #{tpu_custom_call.1} parent=11 // pred_check_branch
          %380 = sbr.rel (%p378) target = $region44
        $region43: #{tpu_custom_call.1} parent=11 // pred_region
          %s382 = ssub.s32 16, 16
          %383 = vsyncadd [#allocation8], %s382
          %s385 = sshll.u32 [#allocation7], 4
          %s386 = int_to_ptr.vmem [resolvable:$true] %s385
          %388 = dma.hbm_to_vmem [thread:$0]  %s8, 16, %s386, [#allocation8]
        $region44: #{tpu_custom_call.1} parent=11 // pred_fallthru
          _
        // Predicated region
        $region45: #{tpu_custom_call.1} parent=11 // pred_check
          %p389 = pneg %p251
        $region46: #{tpu_custom_call.1} parent=11 // pred_check_branch
          %391 = sbr.rel (%p389) target = $region48
        $region47: #{tpu_custom_call.1} parent=11 // pred_region
          _
        $region48: #{tpu_custom_call.1} parent=11 // pred_fallthru
          _
        // Predicated region
        $region49: #{tpu_custom_call.1} parent=11 // pred_check
          %p392 = pneg %p272
        $region50: #{tpu_custom_call.1} parent=11 // pred_check_branch
          %394 = sbr.rel (%p392) target = $region52
        $region51: #{tpu_custom_call.1} parent=11 // pred_region
          %s396 = ssub.s32 16, 16
          %397 = vsyncadd [#allocation11], %s396
          %s399 = sshll.u32 [#allocation10], 4
          %s400 = int_to_ptr.vmem [resolvable:$true] %s399
          %402 = dma.hbm_to_vmem [thread:$0]  %s10, 16, %s400, [#allocation11]
        $region52: #{tpu_custom_call.1} parent=11 // pred_fallthru
          _
        // Predicated region
        $region53: #{tpu_custom_call.1} parent=11 // pred_check
          %p403 = pneg %p293
        $region54: #{tpu_custom_call.1} parent=11 // pred_check_branch
          %405 = sbr.rel (%p403) target = $region56
        $region55: #{tpu_custom_call.1} parent=11 // pred_region
          _
        $region56: #{tpu_custom_call.1} parent=11 // pred_fallthru
          _
        // Predicated region
        $region57: #{tpu_custom_call.1} parent=11 // pred_check
          %p406 = pneg %p314
        $region58: #{tpu_custom_call.1} parent=11 // pred_check_branch
          %408 = sbr.rel (%p406) target = $region60
        $region59: #{tpu_custom_call.1} parent=11 // pred_region
          _
        $region60: #{tpu_custom_call.1} parent=11 // pred_fallthru
          _
      $region12: #{tpu_custom_call.1} parent=5 // pred_fallthru
        _
      %p409 = scmp.lt.s32.totalorder %s24, 2
      // Predicated region
      $region61: #{tpu_custom_call.1} parent=5 // pred_check
        %p410 = pneg %p409
      $region62: #{tpu_custom_call.1} parent=5 // pred_check_branch
        %412 = sbr.rel (%p410) target = $region64
      $region63: #{tpu_custom_call.1} parent=5 // pred_region
        // Predicated region
        $region65: #{tpu_custom_call.1} parent=63 // pred_check
          %p413 = pneg %p56
        $region66: #{tpu_custom_call.1} parent=63 // pred_check_branch
          %415 = sbr.rel (%p413) target = $region68
        $region67: #{tpu_custom_call.1} parent=63 // pred_region
          %p416 = scmp.lt.s32.totalorder %s31, 1
          %s417 = scalar_select %p416, %s31, 1
          %s418 = smul.addr %s417, 8
          %s419 = scalar_lea.vmem %s0, %s418
        $region68: #{tpu_custom_call.1} parent=63 // pred_fallthru
          _
      $region64: #{tpu_custom_call.1} parent=5 // pred_fallthru
        _
      %p420 = scmp.le.s32.totalorder 1, %s24
      %p421 = scmp.lt.s32.totalorder %s24, 3
      %p422 = pnand %p420, %p421
      %p423 = pneg %p422
      // Predicated region
      $region69: #{tpu_custom_call.1} parent=5 // pred_check
        _
      $region70: #{tpu_custom_call.1} parent=5 // pred_check_branch
        %425 = sbr.rel (%p422) target = $region72
      $region71: #{tpu_custom_call.1} parent=5 // pred_region
        %s426 = ssub.s32 %s24, 1
        // Predicated region
        $region73: #{tpu_custom_call.1} parent=71 // pred_check
          %p427 = pneg %p230
        $region74: #{tpu_custom_call.1} parent=71 // pred_check_branch
          %429 = sbr.rel (%p427) target = $region76
        $region75: #{tpu_custom_call.1} parent=71 // pred_region
          %430 = dma.done [#allocation8], 16
        $region76: #{tpu_custom_call.1} parent=71 // pred_fallthru
          _
        // Predicated region
        $region77: #{tpu_custom_call.1} parent=71 // pred_check
          %p431 = pneg %p272
        $region78: #{tpu_custom_call.1} parent=71 // pred_check_branch
          %433 = sbr.rel (%p431) target = $region80
        $region79: #{tpu_custom_call.1} parent=71 // pred_region
          %434 = dma.done [#allocation11], 16
        $region80: #{tpu_custom_call.1} parent=71 // pred_fallthru
          _
        %p435 = scmp.lt.s32.totalorder %s33, 1
        %s436 = scalar_select %p435, %s33, 1
        %s437 = smul.addr %s436, 8
        %s438 = scalar_lea.vmem %s0, %s437
        %p439 = pneg %p62
        %p440 = pneg %p59
        %p441 = pneg %p83
        %p442 = pneg %p80
        %p443 = pneg %p104
        %p444 = pneg %p101
        %p445 = pneg %p125
        %p446 = pneg %p122
        %p447 = pneg %p146
        %p448 = pneg %p143
        %p449 = pneg %p167
        %p450 = pneg %p164
        %p451 = pneg %p188
        %p452 = pneg %p185
        %p453 = pneg %p209
        %p454 = pneg %p206
        %p455 = pneg %p230
        %p456 = pneg %p227
        %p457 = pneg %p251
        %p458 = pneg %p248
        %p459 = pneg %p272
        %p460 = pneg %p269
        %p461 = pneg %p293
        %p462 = pneg %p290
        %p463 = pneg %p314
        %p464 = pneg %p311
        %p465 = pneg %p342
        %p466 = pneg %p339
        %s467 = sand.u32 %s329, 1
        %s468 = scalar_lea.sflag [#allocation9], %s467
        %s469 = sand.u32 %s329, 1
        %s470 = smul.addr %s469, 8
        %s471 = scalar_lea.vmem [#allocation12], %s470
        %p472 = scmp.lt.s32.totalorder %s33, 1
        %s473 = scalar_select %p472, %s33, 1
        %s474 = smul.addr %s473, 8
        %s475 = scalar_lea.vmem %s0, %s474
        %p477 = scmp.eq.s32.totalorder %s34, 0
        // Predicated region
        $region81: #{tpu_custom_call.1} parent=71 // pred_check
          %p478 = pneg %p477
        $region82: #{tpu_custom_call.1} parent=71 // pred_check_branch
          %480 = sbr.rel (%p478) target = $region84
        $region83: #{tpu_custom_call.1} parent=71 // pred_region
          %v481 = vld [vmem:[%s475] sm:$0xff]
          %v482 = vld [vmem:[%s1] sm:$0x1]
          %v483 = vld [vmem:[%s2] sm:$0x1]
          %vm484 = vcmask 261120
          %v485 = vsel %vm484, %v481, 0.0
          %486 = vadd.xlane.f32.xlu0 %v485
          %v487 = vpop.xlane.xlu0 %486
          %v488 = vrcp.pop 32.0
          %v489 = vmul.f32 %v487, %v488
          %v490 = vsub.f32 %v481, %v489
          %v491 = vmul.f32 %v490, %v490
          %v492 = vsel %vm484, %v491, 0.0
          %493 = vadd.xlane.f32.xlu0 %v492
          %v494 = vpop.xlane.xlu0 %493
          %v495 = vmul.f32 %v494, %v488
          %v496 = vadd.f32 %v495, 1e-05
          %v497 = vrsqrt.pop %v496
          %v498 = vmul.f32 %v490, %v497
          %v500 = vlaneseq
          %v501 = vshrl.u32 %v500, 7
          %v502 = vsub.s32 0, %v501
          %v503 = vrot.slane %v482, %v502
          %v505 = vmul.f32 %v498, %v503
          %v507 = vlaneseq
          %v508 = vshrl.u32 %v507, 7
          %v509 = vsub.s32 0, %v508
          %v510 = vrot.slane %v483, %v509
          %v512 = vadd.f32 %v505, %v510
          %v513 = vpack.c.bf16 %v512, %v512
          %vm514 = vcmask 257024
          %515 = vst.msk [vmem:[#allocation2] sm:$0xf] %vm514, %v513
          %v516 = vld [vmem:[#allocation2] sm:$0xf]
          %v517 = vld [vmem:[%s4] sm:$0xf]
          %v518 = vld [vmem:[%s4 + $0x4] sm:$0xf]
          %v519 = vld [vmem:[%s4 + $0x8] sm:$0xf]
          %v520 = vld [vmem:[%s4 + $0xc] sm:$0xf]
          %v525 = vunpack.c.l.b16 %v517
          %v526 = vunpack.c.l.b16 %v518
          %v527 = vunpack.c.l.b16 %v519
          %v528 = vunpack.c.l.b16 %v520
          %v529 = vpack.c.b16 %v526, %v525
          %v530 = vpack.c.b16 %v528, %v527
          %v534 = vsel %vm484, %v516, 0
          %536 = vmatprep.subr.bf16.mxu0 0
          %537 = vmatpush1.bf16.msra.mxu0 0
          %538 = vmatprep.subr.bf16.mxu0 0
          %539 = vmatpush1.bf16.msra.mxu0 0
          %540 = vmatprep.subr.bf16.mxu0 0
          %541 = vmatpush1.bf16.msra.mxu0 0
          %542 = vmatprep.subr.bf16.mxu0 0
          %543 = vmatpush1.bf16.msra.mxu0 0
          %544 = vmatprep.subr.bf16.mxu0 0
          %545 = vmatpush1.bf16.msra.mxu0 0
          %546 = vmatprep.subr.bf16.mxu0 0
          %547 = vmatpush1.bf16.msra.mxu0 0
          %548 = vmatprep.subr.bf16.mxu0 0
          %549 = vmatpush1.bf16.msra.mxu0 %v530
          %550 = vmatprep.subr.bf16.mxu0 0
          %551 = vmatpush1.bf16.msra.mxu0 %v529
          %552 = vmatprep.subr.bf16.mxu0 0
          %553 = vmatpush2.bf16.msra.mxu0 0
          %554 = vmatprep.subr.bf16.mxu0 0
          %555 = vmatpush2.bf16.msra.mxu0 0
          %556 = vmatprep.subr.bf16.mxu0 0
          %557 = vmatpush2.bf16.msra.mxu0 0
          %558 = vmatprep.subr.bf16.mxu0 0
          %559 = vmatpush2.bf16.msra.mxu0 0
          %560 = vmatprep.subr.bf16.mxu0 0
          %561 = vmatpush2.bf16.msra.mxu0 0
          %562 = vmatprep.subr.bf16.mxu0 0
          %563 = vmatpush2.bf16.msra.mxu0 0
          %564 = vmatprep.subr.bf16.mxu0 0
          %565 = vmatpush2.bf16.msra.mxu0 0
          %566 = vmatprep.subr.bf16.mxu0 0
          %567 = vmatpush2.bf16.msra.mxu0 0
          %568 = vmatprep.mubr.bf16.mxu0 0
          %569 = vmatmul.mubr.bf16.gmra.mxu0 %v534
          %v570 = vpop.f32.mrf.mxu0
          %v571 = vadd.f32 0.0, %v570
          %v572 = vpop.f32.mrf.mxu0
          %v573 = vpop.f32.mrf.mxu0
          %v574 = vpop.f32.mrf.mxu0
          %575 = vdwg.mxu0
          %v576 = vpack.c.bf16 %v571, %v571
          %vm577 = vcmask 60416
          %578 = vst.msk [vmem:[#allocation3] sm:$0xf] %vm577, %v576
          %v580 = vunpack.c.l.b16 %v576
          %v581 = vpack.c.b16 %v580, %v580
          %582 = vrot.lane.b32.xlu0 %v581, 96
          %v583 = vpop.permute.xlu0 %582
          %585 = vst.msk [vmem:[#allocation4] sm:$0xf] %vm577, %v583
          %586 = vrot.lane.b32.xlu0 %v581, 120
          %v587 = vpop.permute.xlu0 %586
          %s589 = scalar_lea.vmem [#allocation3], 4
          %590 = vst.msk [vmem:[%s589] sm:$0xf] %vm577, %v587
          %591 = vrot.lane.b32.xlu0 %v581, 88
          %v592 = vpop.permute.xlu0 %591
          %s594 = scalar_lea.vmem [#allocation4], 4
          %595 = vst.msk [vmem:[%s594] sm:$0xf] %vm577, %v592
          %596 = vrot.lane.b32.xlu0 %v581, 112
          %v597 = vpop.permute.xlu0 %596
          %s599 = scalar_lea.vmem [#allocation3], 8
          %600 = vst.msk [vmem:[%s599] sm:$0xf] %vm577, %v597
          %601 = vrot.lane.b32.xlu0 %v581, 80
          %v602 = vpop.permute.xlu0 %601
          %s604 = scalar_lea.vmem [#allocation4], 8
          %605 = vst.msk [vmem:[%s604] sm:$0xf] %vm577, %v602
          %606 = vrot.lane.b32.xlu0 %v581, 104
          %v607 = vpop.permute.xlu0 %606
          %s609 = scalar_lea.vmem [#allocation3], 12
          %610 = vst.msk [vmem:[%s609] sm:$0xf] %vm577, %v607
          %611 = vrot.lane.b32.xlu0 %v581, 72
          %v612 = vpop.permute.xlu0 %611
          %s614 = scalar_lea.vmem [#allocation4], 12
          %615 = vst.msk [vmem:[%s614] sm:$0xf] %vm577, %v612
        $region84: #{tpu_custom_call.1} parent=71 // pred_fallthru
          _
        %s616 = smul.u32 %s34, 8
        %s617 = scalar_lea.vmem %s475, %s616
        %v618 = vld [vmem:[%s617] sm:$0xff]
        %s619 = sshra.s32 %s616, 3
        %s620 = sand.u32 %s616, 7
        %s621 = smul.addr %s619, 4
        %s622 = scalar_lea.vmem [#allocation2], %s621
        %v623 = vld [vmem:[%s622] sm:$0xf]
        %v624 = vld [vmem:[%s3] sm:$0xf]
        %v625 = vld [vmem:[%s3 + $0x4] sm:$0xf]
        %v626 = vld [vmem:[%s3 + $0x8] sm:$0xf]
        %v627 = vld [vmem:[%s3 + $0xc] sm:$0xf]
        %v632 = vunpack.c.l.b16 %v624
        %v633 = vunpack.c.l.b16 %v625
        %v634 = vunpack.c.l.b16 %v626
        %v635 = vunpack.c.l.b16 %v627
        %v636 = vpack.c.b16 %v633, %v632
        %v637 = vpack.c.b16 %v635, %v634
        %vm640 = vcmask 261120
        %v642 = vsel %vm640, %v623, 0
        %644 = vmatprep.subr.bf16.mxu0 0
        %645 = vmatpush1.bf16.msra.mxu0 0
        %646 = vmatprep.subr.bf16.mxu0 0
        %647 = vmatpush1.bf16.msra.mxu0 0
        %648 = vmatprep.subr.bf16.mxu0 0
        %649 = vmatpush1.bf16.msra.mxu0 0
        %650 = vmatprep.subr.bf16.mxu0 0
        %651 = vmatpush1.bf16.msra.mxu0 0
        %652 = vmatprep.subr.bf16.mxu0 0
        %653 = vmatpush1.bf16.msra.mxu0 0
        %654 = vmatprep.subr.bf16.mxu0 0
        %655 = vmatpush1.bf16.msra.mxu0 0
        %656 = vmatprep.subr.bf16.mxu0 0
        %657 = vmatpush1.bf16.msra.mxu0 %v637
        %658 = vmatprep.subr.bf16.mxu0 0
        %659 = vmatpush1.bf16.msra.mxu0 %v636
        %660 = vmatprep.subr.bf16.mxu0 0
        %661 = vmatpush2.bf16.msra.mxu0 0
        %662 = vmatprep.subr.bf16.mxu0 0
        %663 = vmatpush2.bf16.msra.mxu0 0
        %664 = vmatprep.subr.bf16.mxu0 0
        %665 = vmatpush2.bf16.msra.mxu0 0
        %666 = vmatprep.subr.bf16.mxu0 0
        %667 = vmatpush2.bf16.msra.mxu0 0
        %668 = vmatprep.subr.bf16.mxu0 0
        %669 = vmatpush2.bf16.msra.mxu0 0
        %670 = vmatprep.subr.bf16.mxu0 0
        %671 = vmatpush2.bf16.msra.mxu0 0
        %672 = vmatprep.subr.bf16.mxu0 0
        %673 = vmatpush2.bf16.msra.mxu0 0
        %674 = vmatprep.subr.bf16.mxu0 0
        %675 = vmatpush2.bf16.msra.mxu0 0
        %676 = vmatprep.mubr.bf16.mxu0 0
        %677 = vmatmul.mubr.bf16.gmra.mxu0 %v642
        %v678 = vpop.f32.mrf.mxu0
        %v679 = vadd.f32 0.0, %v678
        %v680 = vpop.f32.mrf.mxu0
        %v681 = vpop.f32.mrf.mxu0
        %v682 = vpop.f32.mrf.mxu0
        %683 = vdwg.mxu0
        %v684 = vmul.f32 %v679, 0.35355338
        %v685 = vpack.c.bf16 %v684, %v684
        %vm686 = vcmask 60416
        %687 = vst.msk [vmem:[#allocation5] sm:$0xf] %vm686, %v685
        %v689 = vunpack.c.l.b16 %v685
        %v690 = vpack.c.b16 %v689, %v689
        %691 = vrot.lane.b32.xlu0 %v690, 120
        %v692 = vpop.permute.xlu0 %691
        %s694 = scalar_lea.vmem [#allocation5], 4
        %695 = vst.msk [vmem:[%s694] sm:$0xf] %vm686, %v692
        %696 = vrot.lane.b32.xlu0 %v690, 112
        %v697 = vpop.permute.xlu0 %696
        %s699 = scalar_lea.vmem [#allocation5], 8
        %700 = vst.msk [vmem:[%s699] sm:$0xf] %vm686, %v697
        %701 = vrot.lane.b32.xlu0 %v690, 104
        %v702 = vpop.permute.xlu0 %701
        %s704 = scalar_lea.vmem [#allocation5], 12
        %705 = vst.msk [vmem:[%s704] sm:$0xf] %vm686, %v702
        %v706 = vld [vmem:[#allocation5] sm:$0xf]
        %v707 = vld [vmem:[#allocation5 + $0x4] sm:$0xf]
        %v708 = vld [vmem:[#allocation5 + $0x8] sm:$0xf]
        %v709 = vld [vmem:[#allocation5 + $0xc] sm:$0xf]
        %v710 = vld [vmem:[#allocation3] sm:$0xf]
        %v711 = vld [vmem:[#allocation3 + $0x4] sm:$0xf]
        %v712 = vld [vmem:[#allocation3 + $0x8] sm:$0xf]
        %v713 = vld [vmem:[#allocation3 + $0xc] sm:$0xf]
        %vm714 = vcmask 64512
        %v716 = vsel %vm714, %v706, 0
        %v719 = vsel %vm714, %v710, 0
        %721 = vmatprep.subr.bf16.mxu0 0
        %722 = vmatpush1.bf16.xpose.msra.mxu0 0
        %723 = vmatprep.subr.bf16.mxu0 0
        %724 = vmatpush1.bf16.xpose.msra.mxu0 0
        %725 = vmatprep.subr.bf16.mxu0 0
        %726 = vmatpush1.bf16.xpose.msra.mxu0 0
        %727 = vmatprep.subr.bf16.mxu0 0
        %728 = vmatpush1.bf16.xpose.msra.mxu0 0
        %729 = vmatprep.subr.bf16.mxu0 0
        %730 = vmatpush1.bf16.xpose.msra.mxu0 0
        %731 = vmatprep.subr.bf16.mxu0 0
        %732 = vmatpush1.bf16.xpose.msra.mxu0 0
        %733 = vmatprep.subr.bf16.mxu0 0
        %734 = vmatpush1.bf16.xpose.msra.mxu0 0
        %735 = vmatprep.subr.bf16.mxu0 0
        %736 = vmatpush1.bf16.xpose.msra.mxu0 %v719
        %737 = vmatprep.subr.bf16.mxu0 0
        %738 = vmatpush2.bf16.xpose.msra.mxu0 0
        %739 = vmatprep.subr.bf16.mxu0 0
        %740 = vmatpush2.bf16.xpose.msra.mxu0 0
        %741 = vmatprep.subr.bf16.mxu0 0
        %742 = vmatpush2.bf16.xpose.msra.mxu0 0
        %743 = vmatprep.subr.bf16.mxu0 0
        %744 = vmatpush2.bf16.xpose.msra.mxu0 0
        %745 = vmatprep.subr.bf16.mxu0 0
        %746 = vmatpush2.bf16.xpose.msra.mxu0 0
        %747 = vmatprep.subr.bf16.mxu0 0
        %748 = vmatpush2.bf16.xpose.msra.mxu0 0
        %749 = vmatprep.subr.bf16.mxu0 0
        %750 = vmatpush2.bf16.xpose.msra.mxu0 0
        %751 = vmatprep.subr.bf16.mxu0 0
        %752 = vmatpush2.bf16.xpose.msra.mxu0 0
        %753 = vmatprep.mubr.bf16.mxu0 0
        %754 = vmatmul.mubr.bf16.gmra.mxu0 %v716
        %v755 = vpop.f32.mrf.mxu0
        %v756 = vadd.f32 0.0, %v755
        %v757 = vpop.f32.mrf.mxu0
        %v758 = vpop.f32.mrf.mxu0
        %v759 = vpop.f32.mrf.mxu0
        %760 = vdwg.mxu0
        %v762 = vsel %vm714, %v707, 0
        %v765 = vsel %vm714, %v711, 0
        %767 = vmatprep.subr.bf16.mxu0 0
        %768 = vmatpush1.bf16.xpose.msra.mxu0 0
        %769 = vmatprep.subr.bf16.mxu0 0
        %770 = vmatpush1.bf16.xpose.msra.mxu0 0
        %771 = vmatprep.subr.bf16.mxu0 0
        %772 = vmatpush1.bf16.xpose.msra.mxu0 0
        %773 = vmatprep.subr.bf16.mxu0 0
        %774 = vmatpush1.bf16.xpose.msra.mxu0 0
        %775 = vmatprep.subr.bf16.mxu0 0
        %776 = vmatpush1.bf16.xpose.msra.mxu0 0
        %777 = vmatprep.subr.bf16.mxu0 0
        %778 = vmatpush1.bf16.xpose.msra.mxu0 0
        %779 = vmatprep.subr.bf16.mxu0 0
        %780 = vmatpush1.bf16.xpose.msra.mxu0 0
        %781 = vmatprep.subr.bf16.mxu0 0
        %782 = vmatpush1.bf16.xpose.msra.mxu0 %v765
        %783 = vmatprep.subr.bf16.mxu0 0
        %784 = vmatpush2.bf16.xpose.msra.mxu0 0
        %785 = vmatprep.subr.bf16.mxu0 0
        %786 = vmatpush2.bf16.xpose.msra.mxu0 0
        %787 = vmatprep.subr.bf16.mxu0 0
        %788 = vmatpush2.bf16.xpose.msra.mxu0 0
        %789 = vmatprep.subr.bf16.mxu0 0
        %790 = vmatpush2.bf16.xpose.msra.mxu0 0
        %791 = vmatprep.subr.bf16.mxu0 0
        %792 = vmatpush2.bf16.xpose.msra.mxu0 0
        %793 = vmatprep.subr.bf16.mxu0 0
        %794 = vmatpush2.bf16.xpose.msra.mxu0 0
        %795 = vmatprep.subr.bf16.mxu0 0
        %796 = vmatpush2.bf16.xpose.msra.mxu0 0
        %797 = vmatprep.subr.bf16.mxu0 0
        %798 = vmatpush2.bf16.xpose.msra.mxu0 0
        %799 = vmatprep.mubr.bf16.mxu0 0
        %800 = vmatmul.mubr.bf16.gmra.mxu0 %v762
        %v801 = vpop.f32.mrf.mxu0
        %v802 = vadd.f32 0.0, %v801
        %v803 = vpop.f32.mrf.mxu0
        %v804 = vpop.f32.mrf.mxu0
        %v805 = vpop.f32.mrf.mxu0
        %806 = vdwg.mxu0
        %v808 = vsel %vm714, %v708, 0
        %v811 = vsel %vm714, %v712, 0
        %813 = vmatprep.subr.bf16.mxu0 0
        %814 = vmatpush1.bf16.xpose.msra.mxu0 0
        %815 = vmatprep.subr.bf16.mxu0 0
        %816 = vmatpush1.bf16.xpose.msra.mxu0 0
        %817 = vmatprep.subr.bf16.mxu0 0
        %818 = vmatpush1.bf16.xpose.msra.mxu0 0
        %819 = vmatprep.subr.bf16.mxu0 0
        %820 = vmatpush1.bf16.xpose.msra.mxu0 0
        %821 = vmatprep.subr.bf16.mxu0 0
        %822 = vmatpush1.bf16.xpose.msra.mxu0 0
        %823 = vmatprep.subr.bf16.mxu0 0
        %824 = vmatpush1.bf16.xpose.msra.mxu0 0
        %825 = vmatprep.subr.bf16.mxu0 0
        %826 = vmatpush1.bf16.xpose.msra.mxu0 0
        %827 = vmatprep.subr.bf16.mxu0 0
        %828 = vmatpush1.bf16.xpose.msra.mxu0 %v811
        %829 = vmatprep.subr.bf16.mxu0 0
        %830 = vmatpush2.bf16.xpose.msra.mxu0 0
        %831 = vmatprep.subr.bf16.mxu0 0
        %832 = vmatpush2.bf16.xpose.msra.mxu0 0
        %833 = vmatprep.subr.bf16.mxu0 0
        %834 = vmatpush2.bf16.xpose.msra.mxu0 0
        %835 = vmatprep.subr.bf16.mxu0 0
        %836 = vmatpush2.bf16.xpose.msra.mxu0 0
        %837 = vmatprep.subr.bf16.mxu0 0
        %838 = vmatpush2.bf16.xpose.msra.mxu0 0
        %839 = vmatprep.subr.bf16.mxu0 0
        %840 = vmatpush2.bf16.xpose.msra.mxu0 0
        %841 = vmatprep.subr.bf16.mxu0 0
        %842 = vmatpush2.bf16.xpose.msra.mxu0 0
        %843 = vmatprep.subr.bf16.mxu0 0
        %844 = vmatpush2.bf16.xpose.msra.mxu0 0
        %845 = vmatprep.mubr.bf16.mxu0 0
        %846 = vmatmul.mubr.bf16.gmra.mxu0 %v808
        %v847 = vpop.f32.mrf.mxu0
        %v848 = vadd.f32 0.0, %v847
        %v849 = vpop.f32.mrf.mxu0
        %v850 = vpop.f32.mrf.mxu0
        %v851 = vpop.f32.mrf.mxu0
        %852 = vdwg.mxu0
        %v854 = vsel %vm714, %v709, 0
        %v857 = vsel %vm714, %v713, 0
        %859 = vmatprep.subr.bf16.mxu0 0
        %860 = vmatpush1.bf16.xpose.msra.mxu0 0
        %861 = vmatprep.subr.bf16.mxu0 0
        %862 = vmatpush1.bf16.xpose.msra.mxu0 0
        %863 = vmatprep.subr.bf16.mxu0 0
        %864 = vmatpush1.bf16.xpose.msra.mxu0 0
        %865 = vmatprep.subr.bf16.mxu0 0
        %866 = vmatpush1.bf16.xpose.msra.mxu0 0
        %867 = vmatprep.subr.bf16.mxu0 0
        %868 = vmatpush1.bf16.xpose.msra.mxu0 0
        %869 = vmatprep.subr.bf16.mxu0 0
        %870 = vmatpush1.bf16.xpose.msra.mxu0 0
        %871 = vmatprep.subr.bf16.mxu0 0
        %872 = vmatpush1.bf16.xpose.msra.mxu0 0
        %873 = vmatprep.subr.bf16.mxu0 0
        %874 = vmatpush1.bf16.xpose.msra.mxu0 %v857
        %875 = vmatprep.subr.bf16.mxu0 0
        %876 = vmatpush2.bf16.xpose.msra.mxu0 0
        %877 = vmatprep.subr.bf16.mxu0 0
        %878 = vmatpush2.bf16.xpose.msra.mxu0 0
        %879 = vmatprep.subr.bf16.mxu0 0
        %880 = vmatpush2.bf16.xpose.msra.mxu0 0
        %881 = vmatprep.subr.bf16.mxu0 0
        %882 = vmatpush2.bf16.xpose.msra.mxu0 0
        %883 = vmatprep.subr.bf16.mxu0 0
        %884 = vmatpush2.bf16.xpose.msra.mxu0 0
        %885 = vmatprep.subr.bf16.mxu0 0
        %886 = vmatpush2.bf16.xpose.msra.mxu0 0
        %887 = vmatprep.subr.bf16.mxu0 0
        %888 = vmatpush2.bf16.xpose.msra.mxu0 0
        %889 = vmatprep.subr.bf16.mxu0 0
        %890 = vmatpush2.bf16.xpose.msra.mxu0 0
        %891 = vmatprep.mubr.bf16.mxu0 0
        %892 = vmatmul.mubr.bf16.gmra.mxu0 %v854
        %v893 = vpop.f32.mrf.mxu0
        %v894 = vadd.f32 0.0, %v893
        %v895 = vpop.f32.mrf.mxu0
        %v896 = vpop.f32.mrf.mxu0
        %v897 = vpop.f32.mrf.mxu0
        %898 = vdwg.mxu0
        %v899 = vsel %vm714, %v756, -inf
        %900 = vmax.xlane.f32.xlu0 %v899
        %v901 = vpop.xlane.xlu0 %900
        %v902 = vsel %vm714, %v802, -inf
        %903 = vmax.xlane.f32.xlu0 %v902
        %v904 = vpop.xlane.xlu0 %903
        %v905 = vsel %vm714, %v848, -inf
        %906 = vmax.xlane.f32.xlu0 %v905
        %v907 = vpop.xlane.xlu0 %906
        %v908 = vsel %vm714, %v894, -inf
        %909 = vmax.xlane.f32.xlu0 %v908
        %v910 = vpop.xlane.xlu0 %909
        %v911 = vsub.f32 %v756, %v901
        %v912 = vsub.f32 %v802, %v904
        %v913 = vsub.f32 %v848, %v907
        %v914 = vsub.f32 %v894, %v910
        %v915 = vmul.f32 %v911, 1.442695
        %v916 = vpow.pop %v915
        %v917 = vmul.f32 %v912, 1.442695
        %v918 = vpow.pop %v917
        %v919 = vmul.f32 %v913, 1.442695
        %v920 = vpow.pop %v919
        %v921 = vmul.f32 %v914, 1.442695
        %v922 = vpow.pop %v921
        %v923 = vsel %vm714, %v916, 0.0
        %924 = vadd.xlane.f32.xlu0 %v923
        %v925 = vpop.xlane.xlu0 %924
        %v926 = vsel %vm714, %v918, 0.0
        %927 = vadd.xlane.f32.xlu0 %v926
        %v928 = vpop.xlane.xlu0 %927
        %v929 = vsel %vm714, %v920, 0.0
        %930 = vadd.xlane.f32.xlu0 %v929
        %v931 = vpop.xlane.xlu0 %930
        %v932 = vsel %vm714, %v922, 0.0
        %933 = vadd.xlane.f32.xlu0 %v932
        %v934 = vpop.xlane.xlu0 %933
        %v935 = vrcp.pop %v925
        %v936 = vrcp.pop %v928
        %v937 = vrcp.pop %v931
        %v938 = vrcp.pop %v934
        %v939 = vmul.f32 %v916, %v935
        %v940 = vmul.f32 %v918, %v936
        %v941 = vmul.f32 %v920, %v937
        %v942 = vmul.f32 %v922, %v938
        %v943 = vpack.c.bf16 %v939, %v939
        %v944 = vpack.c.bf16 %v940, %v940
        %v945 = vpack.c.bf16 %v941, %v941
        %v946 = vpack.c.bf16 %v942, %v942
        %v947 = vld [vmem:[#allocation4] sm:$0xf]
        %v948 = vld [vmem:[#allocation4 + $0x4] sm:$0xf]
        %v949 = vld [vmem:[#allocation4 + $0x8] sm:$0xf]
        %v950 = vld [vmem:[#allocation4 + $0xc] sm:$0xf]
        %v952 = vsel %vm714, %v943, 0
        %vm954 = vcmask 1043456
        %v956 = vsel %vm954, %v947, 0
        %958 = vmatprep.subr.bf16.mxu0 0
        %959 = vmatpush1.bf16.msra.mxu0 0
        %960 = vmatprep.subr.bf16.mxu0 0
        %961 = vmatpush1.bf16.msra.mxu0 0
        %962 = vmatprep.subr.bf16.mxu0 0
        %963 = vmatpush1.bf16.msra.mxu0 0
        %964 = vmatprep.subr.bf16.mxu0 0
        %965 = vmatpush1.bf16.msra.mxu0 0
        %966 = vmatprep.subr.bf16.mxu0 0
        %967 = vmatpush1.bf16.msra.mxu0 0
        %968 = vmatprep.subr.bf16.mxu0 0
        %969 = vmatpush1.bf16.msra.mxu0 0
        %970 = vmatprep.subr.bf16.mxu0 0
        %971 = vmatpush1.bf16.msra.mxu0 0
        %972 = vmatprep.subr.bf16.mxu0 0
        %973 = vmatpush1.bf16.msra.mxu0 %v956
        %974 = vmatprep.subr.bf16.mxu0 0
        %975 = vmatpush2.bf16.msra.mxu0 0
        %976 = vmatprep.subr.bf16.mxu0 0
        %977 = vmatpush2.bf16.msra.mxu0 0
        %978 = vmatprep.subr.bf16.mxu0 0
        %979 = vmatpush2.bf16.msra.mxu0 0
        %980 = vmatprep.subr.bf16.mxu0 0
        %981 = vmatpush2.bf16.msra.mxu0 0
        %982 = vmatprep.subr.bf16.mxu0 0
        %983 = vmatpush2.bf16.msra.mxu0 0
        %984 = vmatprep.subr.bf16.mxu0 0
        %985 = vmatpush2.bf16.msra.mxu0 0
        %986 = vmatprep.subr.bf16.mxu0 0
        %987 = vmatpush2.bf16.msra.mxu0 0
        %988 = vmatprep.subr.bf16.mxu0 0
        %989 = vmatpush2.bf16.msra.mxu0 0
        %990 = vmatprep.mubr.bf16.mxu0 0
        %991 = vmatmul.mubr.bf16.gmra.mxu0 %v952
        %v992 = vpop.f32.mrf.mxu0
        %v993 = vadd.f32 0.0, %v992
        %v994 = vpop.f32.mrf.mxu0
        %v995 = vpop.f32.mrf.mxu0
        %v996 = vpop.f32.mrf.mxu0
        %997 = vdwg.mxu0
        %v999 = vsel %vm714, %v944, 0
        %v1002 = vsel %vm954, %v948, 0
        %1004 = vmatprep.subr.bf16.mxu0 0
        %1005 = vmatpush1.bf16.msra.mxu0 0
        %1006 = vmatprep.subr.bf16.mxu0 0
        %1007 = vmatpush1.bf16.msra.mxu0 0
        %1008 = vmatprep.subr.bf16.mxu0 0
        %1009 = vmatpush1.bf16.msra.mxu0 0
        %1010 = vmatprep.subr.bf16.mxu0 0
        %1011 = vmatpush1.bf16.msra.mxu0 0
        %1012 = vmatprep.subr.bf16.mxu0 0
        %1013 = vmatpush1.bf16.msra.mxu0 0
        %1014 = vmatprep.subr.bf16.mxu0 0
        %1015 = vmatpush1.bf16.msra.mxu0 0
        %1016 = vmatprep.subr.bf16.mxu0 0
        %1017 = vmatpush1.bf16.msra.mxu0 0
        %1018 = vmatprep.subr.bf16.mxu0 0
        %1019 = vmatpush1.bf16.msra.mxu0 %v1002
        %1020 = vmatprep.subr.bf16.mxu0 0
        %1021 = vmatpush2.bf16.msra.mxu0 0
        %1022 = vmatprep.subr.bf16.mxu0 0
        %1023 = vmatpush2.bf16.msra.mxu0 0
        %1024 = vmatprep.subr.bf16.mxu0 0
        %1025 = vmatpush2.bf16.msra.mxu0 0
        %1026 = vmatprep.subr.bf16.mxu0 0
        %1027 = vmatpush2.bf16.msra.mxu0 0
        %1028 = vmatprep.subr.bf16.mxu0 0
        %1029 = vmatpush2.bf16.msra.mxu0 0
        %1030 = vmatprep.subr.bf16.mxu0 0
        %1031 = vmatpush2.bf16.msra.mxu0 0
        %1032 = vmatprep.subr.bf16.mxu0 0
        %1033 = vmatpush2.bf16.msra.mxu0 0
        %1034 = vmatprep.subr.bf16.mxu0 0
        %1035 = vmatpush2.bf16.msra.mxu0 0
        %1036 = vmatprep.mubr.bf16.mxu0 0
        %1037 = vmatmul.mubr.bf16.gmra.mxu0 %v999
        %v1038 = vpop.f32.mrf.mxu0
        %v1039 = vadd.f32 0.0, %v1038
        %v1040 = vpop.f32.mrf.mxu0
        %v1041 = vpop.f32.mrf.mxu0
        %v1042 = vpop.f32.mrf.mxu0
        %1043 = vdwg.mxu0
        %v1045 = vsel %vm714, %v945, 0
        %v1048 = vsel %vm954, %v949, 0
        %1050 = vmatprep.subr.bf16.mxu0 0
        %1051 = vmatpush1.bf16.msra.mxu0 0
        %1052 = vmatprep.subr.bf16.mxu0 0
        %1053 = vmatpush1.bf16.msra.mxu0 0
        %1054 = vmatprep.subr.bf16.mxu0 0
        %1055 = vmatpush1.bf16.msra.mxu0 0
        %1056 = vmatprep.subr.bf16.mxu0 0
        %1057 = vmatpush1.bf16.msra.mxu0 0
        %1058 = vmatprep.subr.bf16.mxu0 0
        %1059 = vmatpush1.bf16.msra.mxu0 0
        %1060 = vmatprep.subr.bf16.mxu0 0
        %1061 = vmatpush1.bf16.msra.mxu0 0
        %1062 = vmatprep.subr.bf16.mxu0 0
        %1063 = vmatpush1.bf16.msra.mxu0 0
        %1064 = vmatprep.subr.bf16.mxu0 0
        %1065 = vmatpush1.bf16.msra.mxu0 %v1048
        %1066 = vmatprep.subr.bf16.mxu0 0
        %1067 = vmatpush2.bf16.msra.mxu0 0
        %1068 = vmatprep.subr.bf16.mxu0 0
        %1069 = vmatpush2.bf16.msra.mxu0 0
        %1070 = vmatprep.subr.bf16.mxu0 0
        %1071 = vmatpush2.bf16.msra.mxu0 0
        %1072 = vmatprep.subr.bf16.mxu0 0
        %1073 = vmatpush2.bf16.msra.mxu0 0
        %1074 = vmatprep.subr.bf16.mxu0 0
        %1075 = vmatpush2.bf16.msra.mxu0 0
        %1076 = vmatprep.subr.bf16.mxu0 0
        %1077 = vmatpush2.bf16.msra.mxu0 0
        %1078 = vmatprep.subr.bf16.mxu0 0
        %1079 = vmatpush2.bf16.msra.mxu0 0
        %1080 = vmatprep.subr.bf16.mxu0 0
        %1081 = vmatpush2.bf16.msra.mxu0 0
        %1082 = vmatprep.mubr.bf16.mxu0 0
        %1083 = vmatmul.mubr.bf16.gmra.mxu0 %v1045
        %v1084 = vpop.f32.mrf.mxu0
        %v1085 = vadd.f32 0.0, %v1084
        %v1086 = vpop.f32.mrf.mxu0
        %v1087 = vpop.f32.mrf.mxu0
        %v1088 = vpop.f32.mrf.mxu0
        %1089 = vdwg.mxu0
        %v1091 = vsel %vm714, %v946, 0
        %v1094 = vsel %vm954, %v950, 0
        %1096 = vmatprep.subr.bf16.mxu0 0
        %1097 = vmatpush1.bf16.msra.mxu0 0
        %1098 = vmatprep.subr.bf16.mxu0 0
        %1099 = vmatpush1.bf16.msra.mxu0 0
        %1100 = vmatprep.subr.bf16.mxu0 0
        %1101 = vmatpush1.bf16.msra.mxu0 0
        %1102 = vmatprep.subr.bf16.mxu0 0
        %1103 = vmatpush1.bf16.msra.mxu0 0
        %1104 = vmatprep.subr.bf16.mxu0 0
        %1105 = vmatpush1.bf16.msra.mxu0 0
        %1106 = vmatprep.subr.bf16.mxu0 0
        %1107 = vmatpush1.bf16.msra.mxu0 0
        %1108 = vmatprep.subr.bf16.mxu0 0
        %1109 = vmatpush1.bf16.msra.mxu0 0
        %1110 = vmatprep.subr.bf16.mxu0 0
        %1111 = vmatpush1.bf16.msra.mxu0 %v1094
        %1112 = vmatprep.subr.bf16.mxu0 0
        %1113 = vmatpush2.bf16.msra.mxu0 0
        %1114 = vmatprep.subr.bf16.mxu0 0
        %1115 = vmatpush2.bf16.msra.mxu0 0
        %1116 = vmatprep.subr.bf16.mxu0 0
        %1117 = vmatpush2.bf16.msra.mxu0 0
        %1118 = vmatprep.subr.bf16.mxu0 0
        %1119 = vmatpush2.bf16.msra.mxu0 0
        %1120 = vmatprep.subr.bf16.mxu0 0
        %1121 = vmatpush2.bf16.msra.mxu0 0
        %1122 = vmatprep.subr.bf16.mxu0 0
        %1123 = vmatpush2.bf16.msra.mxu0 0
        %1124 = vmatprep.subr.bf16.mxu0 0
        %1125 = vmatpush2.bf16.msra.mxu0 0
        %1126 = vmatprep.subr.bf16.mxu0 0
        %1127 = vmatpush2.bf16.msra.mxu0 0
        %1128 = vmatprep.mubr.bf16.mxu0 0
        %1129 = vmatmul.mubr.bf16.gmra.mxu0 %v1091
        %v1130 = vpop.f32.mrf.mxu0
        %v1131 = vadd.f32 0.0, %v1130
        %v1132 = vpop.f32.mrf.mxu0
        %v1133 = vpop.f32.mrf.mxu0
        %v1134 = vpop.f32.mrf.mxu0
        %1135 = vdwg.mxu0
        %v1136 = vpack.c.bf16 %v993, %v993
        %1137 = vst.msk [vmem:[#allocation6] sm:$0xf] %vm686, %v1136
        %v1138 = vpack.c.bf16 %v1039, %v1039
        %v1140 = vunpack.c.l.b16 %v1138
        %v1141 = vpack.c.b16 %v1140, %v1140
        %1142 = vrot.lane.b32.xlu0 %v1141, 8
        %v1143 = vpop.permute.xlu0 %1142
        %vm1145 = vcmask 126016
        %1146 = vst.msk [vmem:[#allocation6] sm:$0xf] %vm1145, %v1143
        %v1147 = vpack.c.bf16 %v1085, %v1085
        %v1149 = vunpack.c.l.b16 %v1147
        %v1150 = vpack.c.b16 %v1149, %v1149
        %1151 = vrot.lane.b32.xlu0 %v1150, 16
        %v1152 = vpop.permute.xlu0 %1151
        %vm1154 = vcmask 191616
        %1155 = vst.msk [vmem:[#allocation6] sm:$0xf] %vm1154, %v1152
        %v1156 = vpack.c.bf16 %v1131, %v1131
        %v1158 = vunpack.c.l.b16 %v1156
        %v1159 = vpack.c.b16 %v1158, %v1158
        %1160 = vrot.lane.b32.xlu0 %v1159, 24
        %v1161 = vpop.permute.xlu0 %1160
        %vm1163 = vcmask 257216
        %1164 = vst.msk [vmem:[#allocation6] sm:$0xf] %vm1163, %v1161
        %v1165 = vld [vmem:[#allocation6] sm:$0xf]
        %v1166 = vld [vmem:[%s5] sm:$0xf]
        %v1167 = vld [vmem:[%s5 + $0x4] sm:$0xf]
        %v1168 = vld [vmem:[%s5 + $0x8] sm:$0xf]
        %v1169 = vld [vmem:[%s5 + $0xc] sm:$0xf]
        %v1170 = vld [vmem:[%s6] sm:$0x1]
        %v1172 = vlaneseq
        %v1173 = vshrl.u32 %v1172, 7
        %v1174 = vsub.s32 0, %v1173
        %v1175 = vrot.slane %v1170, %v1174
        %v1181 = vunpack.c.l.b16 %v1166
        %v1182 = vunpack.c.l.b16 %v1167
        %v1183 = vunpack.c.l.b16 %v1168
        %v1184 = vunpack.c.l.b16 %v1169
        %v1185 = vpack.c.b16 %v1182, %v1181
        %v1186 = vpack.c.b16 %v1184, %v1183
        %v1190 = vsel %vm640, %v1165, 0
        %1192 = vmatprep.subr.bf16.mxu0 0
        %1193 = vmatpush1.bf16.msra.mxu0 0
        %1194 = vmatprep.subr.bf16.mxu0 0
        %1195 = vmatpush1.bf16.msra.mxu0 0
        %1196 = vmatprep.subr.bf16.mxu0 0
        %1197 = vmatpush1.bf16.msra.mxu0 0
        %1198 = vmatprep.subr.bf16.mxu0 0
        %1199 = vmatpush1.bf16.msra.mxu0 0
        %1200 = vmatprep.subr.bf16.mxu0 0
        %1201 = vmatpush1.bf16.msra.mxu0 0
        %1202 = vmatprep.subr.bf16.mxu0 0
        %1203 = vmatpush1.bf16.msra.mxu0 0
        %1204 = vmatprep.subr.bf16.mxu0 0
        %1205 = vmatpush1.bf16.msra.mxu0 %v1186
        %1206 = vmatprep.subr.bf16.mxu0 0
        %1207 = vmatpush1.bf16.msra.mxu0 %v1185
        %1208 = vmatprep.subr.bf16.mxu0 0
        %1209 = vmatpush2.bf16.msra.mxu0 0
        %1210 = vmatprep.subr.bf16.mxu0 0
        %1211 = vmatpush2.bf16.msra.mxu0 0
        %1212 = vmatprep.subr.bf16.mxu0 0
        %1213 = vmatpush2.bf16.msra.mxu0 0
        %1214 = vmatprep.subr.bf16.mxu0 0
        %1215 = vmatpush2.bf16.msra.mxu0 0
        %1216 = vmatprep.subr.bf16.mxu0 0
        %1217 = vmatpush2.bf16.msra.mxu0 0
        %1218 = vmatprep.subr.bf16.mxu0 0
        %1219 = vmatpush2.bf16.msra.mxu0 0
        %1220 = vmatprep.subr.bf16.mxu0 0
        %1221 = vmatpush2.bf16.msra.mxu0 0
        %1222 = vmatprep.subr.bf16.mxu0 0
        %1223 = vmatpush2.bf16.msra.mxu0 0
        %1224 = vmatprep.mubr.bf16.mxu0 0
        %1225 = vmatmul.mubr.bf16.gmra.mxu0 %v1190
        %v1226 = vpop.f32.mrf.mxu0
        %v1227 = vadd.f32 %v1175, %v1226
        %v1228 = vpop.f32.mrf.mxu0
        %v1229 = vpop.f32.mrf.mxu0
        %v1230 = vpop.f32.mrf.mxu0
        %1231 = vdwg.mxu0
        %v1232 = vadd.f32 %v618, %v1227
        %v1233 = vld [vmem:[%s7] sm:$0x1]
        %v1234 = vld [vmem:[#allocation7] sm:$0x1]
        %v1235 = vsel %vm640, %v1232, 0.0
        %1236 = vadd.xlane.f32.xlu0 %v1235
        %v1237 = vpop.xlane.xlu0 %1236
        %v1238 = vrcp.pop 32.0
        %v1239 = vmul.f32 %v1237, %v1238
        %v1240 = vsub.f32 %v1232, %v1239
        %v1241 = vmul.f32 %v1240, %v1240
        %v1242 = vsel %vm640, %v1241, 0.0
        %1243 = vadd.xlane.f32.xlu0 %v1242
        %v1244 = vpop.xlane.xlu0 %1243
        %v1245 = vmul.f32 %v1244, %v1238
        %v1246 = vadd.f32 %v1245, 1e-05
        %v1247 = vrsqrt.pop %v1246
        %v1248 = vmul.f32 %v1240, %v1247
        %v1250 = vlaneseq
        %v1251 = vshrl.u32 %v1250, 7
        %v1252 = vsub.s32 0, %v1251
        %v1253 = vrot.slane %v1233, %v1252
        %v1255 = vmul.f32 %v1248, %v1253
        %v1257 = vlaneseq
        %v1258 = vshrl.u32 %v1257, 7
        %v1259 = vsub.s32 0, %v1258
        %v1260 = vrot.slane %v1234, %v1259
        %v1262 = vadd.f32 %v1255, %v1260
        %v1263 = vpack.c.bf16 %v1262, %v1262
        %v1264 = vld [vmem:[%s9] sm:$0xf]
        %v1265 = vld [vmem:[%s9 + $0x4] sm:$0xf]
        %v1266 = vld [vmem:[%s9 + $0x8] sm:$0xf]
        %v1267 = vld [vmem:[%s9 + $0xc] sm:$0xf]
        %v1268 = vld [vmem:[#allocation10] sm:$0x1]
        %v1270 = vlaneseq
        %v1271 = vshrl.u32 %v1270, 7
        %v1272 = vsub.s32 0, %v1271
        %v1273 = vrot.slane %v1268, %v1272
        %v1279 = vunpack.c.l.b16 %v1264
        %v1280 = vunpack.c.l.b16 %v1265
        %v1281 = vunpack.c.l.b16 %v1266
        %v1282 = vunpack.c.l.b16 %v1267
        %v1283 = vpack.c.b16 %v1280, %v1279
        %v1284 = vpack.c.b16 %v1282, %v1281
        %v1288 = vsel %vm640, %v1263, 0
        %1290 = vmatprep.subr.bf16.mxu0 0
        %1291 = vmatpush1.bf16.msra.mxu0 0
        %1292 = vmatprep.subr.bf16.mxu0 0
        %1293 = vmatpush1.bf16.msra.mxu0 0
        %1294 = vmatprep.subr.bf16.mxu0 0
        %1295 = vmatpush1.bf16.msra.mxu0 0
        %1296 = vmatprep.subr.bf16.mxu0 0
        %1297 = vmatpush1.bf16.msra.mxu0 0
        %1298 = vmatprep.subr.bf16.mxu0 0
        %1299 = vmatpush1.bf16.msra.mxu0 0
        %1300 = vmatprep.subr.bf16.mxu0 0
        %1301 = vmatpush1.bf16.msra.mxu0 0
        %1302 = vmatprep.subr.bf16.mxu0 0
        %1303 = vmatpush1.bf16.msra.mxu0 %v1284
        %1304 = vmatprep.subr.bf16.mxu0 0
        %1305 = vmatpush1.bf16.msra.mxu0 %v1283
        %1306 = vmatprep.subr.bf16.mxu0 0
        %1307 = vmatpush2.bf16.msra.mxu0 0
        %1308 = vmatprep.subr.bf16.mxu0 0
        %1309 = vmatpush2.bf16.msra.mxu0 0
        %1310 = vmatprep.subr.bf16.mxu0 0
        %1311 = vmatpush2.bf16.msra.mxu0 0
        %1312 = vmatprep.subr.bf16.mxu0 0
        %1313 = vmatpush2.bf16.msra.mxu0 0
        %1314 = vmatprep.subr.bf16.mxu0 0
        %1315 = vmatpush2.bf16.msra.mxu0 0
        %1316 = vmatprep.subr.bf16.mxu0 0
        %1317 = vmatpush2.bf16.msra.mxu0 0
        %1318 = vmatprep.subr.bf16.mxu0 0
        %1319 = vmatpush2.bf16.msra.mxu0 0
        %1320 = vmatprep.subr.bf16.mxu0 0
        %1321 = vmatpush2.bf16.msra.mxu0 0
        %1322 = vmatprep.mubr.bf16.mxu0 0
        %1323 = vmatmul.mubr.bf16.gmra.mxu0 %v1288
        %v1324 = vpop.f32.mrf.mxu0
        %v1325 = vadd.f32 %v1273, %v1324
        %v1326 = vpop.f32.mrf.mxu0
        %v1327 = vpop.f32.mrf.mxu0
        %v1328 = vpop.f32.mrf.mxu0
        %1329 = vdwg.mxu0
        %v1330 = vmul.f32 %v1325, 0.5
        %v1331 = vmul.f32 %v1325, 0.70710677
        %v1332 = verf.f32.pop %v1331
        %v1333 = vadd.f32 %v1332, 1.0
        %v1334 = vmul.f32 %v1330, %v1333
        %v1335 = vpack.c.bf16 %v1334, %v1334
        %v1336 = vld [vmem:[%s11] sm:$0xf]
        %v1337 = vld [vmem:[%s11 + $0x4] sm:$0xf]
        %v1338 = vld [vmem:[%s11 + $0x8] sm:$0xf]
        %v1339 = vld [vmem:[%s11 + $0xc] sm:$0xf]
        %v1340 = vld [vmem:[%s11 + $0x10] sm:$0xf]
        %v1341 = vld [vmem:[%s11 + $0x14] sm:$0xf]
        %v1342 = vld [vmem:[%s11 + $0x18] sm:$0xf]
        %v1343 = vld [vmem:[%s11 + $0x1c] sm:$0xf]
        %v1344 = vld [vmem:[%s11 + $0x20] sm:$0xf]
        %v1345 = vld [vmem:[%s11 + $0x24] sm:$0xf]
        %v1346 = vld [vmem:[%s11 + $0x28] sm:$0xf]
        %v1347 = vld [vmem:[%s11 + $0x2c] sm:$0xf]
        %v1348 = vld [vmem:[%s11 + $0x30] sm:$0xf]
        %v1349 = vld [vmem:[%s11 + $0x34] sm:$0xf]
        %v1350 = vld [vmem:[%s11 + $0x38] sm:$0xf]
        %v1351 = vld [vmem:[%s11 + $0x3c] sm:$0xf]
        %v1352 = vld [vmem:[%s12] sm:$0x1]
        %v1354 = vlaneseq
        %v1355 = vshrl.u32 %v1354, 7
        %v1356 = vsub.s32 0, %v1355
        %v1357 = vrot.slane %v1352, %v1356
        %v1375 = vunpack.c.l.b16 %v1336
        %v1376 = vunpack.c.l.b16 %v1337
        %v1377 = vunpack.c.l.b16 %v1338
        %v1378 = vunpack.c.l.b16 %v1339
        %v1379 = vunpack.c.l.b16 %v1340
        %v1380 = vunpack.c.l.b16 %v1341
        %v1381 = vunpack.c.l.b16 %v1342
        %v1382 = vunpack.c.l.b16 %v1343
        %v1383 = vunpack.c.l.b16 %v1344
        %v1384 = vunpack.c.l.b16 %v1345
        %v1385 = vunpack.c.l.b16 %v1346
        %v1386 = vunpack.c.l.b16 %v1347
        %v1387 = vunpack.c.l.b16 %v1348
        %v1388 = vunpack.c.l.b16 %v1349
        %v1389 = vunpack.c.l.b16 %v1350
        %v1390 = vunpack.c.l.b16 %v1351
        %v1391 = vpack.c.b16 %v1376, %v1375
        %v1392 = vpack.c.b16 %v1378, %v1377
        %v1393 = vpack.c.b16 %v1380, %v1379
        %v1394 = vpack.c.b16 %v1382, %v1381
        %v1395 = vpack.c.b16 %v1384, %v1383
        %v1396 = vpack.c.b16 %v1386, %v1385
        %v1397 = vpack.c.b16 %v1388, %v1387
        %v1398 = vpack.c.b16 %v1390, %v1389
        %1407 = vmatprep.subr.bf16.mxu0 0
        %1408 = vmatpush1.bf16.msra.mxu0 %v1398
        %1409 = vmatprep.subr.bf16.mxu0 0
        %1410 = vmatpush1.bf16.msra.mxu0 %v1397
        %1411 = vmatprep.subr.bf16.mxu0 0
        %1412 = vmatpush1.bf16.msra.mxu0 %v1396
        %1413 = vmatprep.subr.bf16.mxu0 0
        %1414 = vmatpush1.bf16.msra.mxu0 %v1395
        %1415 = vmatprep.subr.bf16.mxu0 0
        %1416 = vmatpush1.bf16.msra.mxu0 %v1394
        %1417 = vmatprep.subr.bf16.mxu0 0
        %1418 = vmatpush1.bf16.msra.mxu0 %v1393
        %1419 = vmatprep.subr.bf16.mxu0 0
        %1420 = vmatpush1.bf16.msra.mxu0 %v1392
        %1421 = vmatprep.subr.bf16.mxu0 0
        %1422 = vmatpush1.bf16.msra.mxu0 %v1391
        %1423 = vmatprep.subr.bf16.mxu0 0
        %1424 = vmatpush2.bf16.msra.mxu0 0
        %1425 = vmatprep.subr.bf16.mxu0 0
        %1426 = vmatpush2.bf16.msra.mxu0 0
        %1427 = vmatprep.subr.bf16.mxu0 0
        %1428 = vmatpush2.bf16.msra.mxu0 0
        %1429 = vmatprep.subr.bf16.mxu0 0
        %1430 = vmatpush2.bf16.msra.mxu0 0
        %1431 = vmatprep.subr.bf16.mxu0 0
        %1432 = vmatpush2.bf16.msra.mxu0 0
        %1433 = vmatprep.subr.bf16.mxu0 0
        %1434 = vmatpush2.bf16.msra.mxu0 0
        %1435 = vmatprep.subr.bf16.mxu0 0
        %1436 = vmatpush2.bf16.msra.mxu0 0
        %1437 = vmatprep.subr.bf16.mxu0 0
        %1438 = vmatpush2.bf16.msra.mxu0 0
        %1439 = vmatprep.mubr.bf16.mxu0 0
        %1440 = vmatmul.mubr.bf16.gmra.mxu0 %v1335
        %v1441 = vpop.f32.mrf.mxu0
        %v1442 = vadd.f32 %v1357, %v1441
        %v1443 = vpop.f32.mrf.mxu0
        %v1444 = vpop.f32.mrf.mxu0
        %v1445 = vpop.f32.mrf.mxu0
        %1446 = vdwg.mxu0
        %v1447 = vadd.f32 %v1232, %v1442
        %1448 = vst.msk [vmem:[%s471] sm:$0xff] %vm640, %v1447
        %s1449 = sand.u32 %s329, 1
        %s1450 = scalar_lea.sflag [#allocation9], %s1449
        %s1451 = sand.u32 %s329, 1
        %s1452 = smul.addr %s1451, 8
        %s1453 = scalar_lea.vmem [#allocation12], %s1452
        // Predicated region
        $region85: #{tpu_custom_call.1} parent=71 // pred_check
          %p1454 = pneg %p339
        $region86: #{tpu_custom_call.1} parent=71 // pred_check_branch
          %1456 = sbr.rel (%p1454) target = $region88
        $region87: #{tpu_custom_call.1} parent=71 // pred_region
          %s1458 = ssub.s32 128, 128
          %1459 = vsyncadd %s1450, %s1458
          %s1460 = sadd.s32 %s34, %s33
          %s1461 = smul.addr %s1460, 128
          %s1462 = scalar_lea.hbm %s13, %s1461
          %s1464 = sshll.u32 %s1453, 4
          %s1465 = int_to_ptr.vmem [resolvable:$true] %s1464
          %1467 = dma.vmem_to_hbm [thread:$0]  %s1465, 128, %s1462, %s1450
        $region88: #{tpu_custom_call.1} parent=71 // pred_fallthru
          _
      $region72: #{tpu_custom_call.1} parent=5 // pred_fallthru
        _
      %p1468 = scmp.le.s32.totalorder 2, %s24
      // Predicated region
      $region89: #{tpu_custom_call.1} parent=5 // pred_check
        %p1469 = pneg %p1468
      $region90: #{tpu_custom_call.1} parent=5 // pred_check_branch
        %1471 = sbr.rel (%p1469) target = $region92
      $region91: #{tpu_custom_call.1} parent=5 // pred_region
        %s1472 = ssub.s32 %s24, 2
        // Predicated region
        $region93: #{tpu_custom_call.1} parent=91 // pred_check
          %p1473 = pneg %p345
        $region94: #{tpu_custom_call.1} parent=91 // pred_check_branch
          %1475 = sbr.rel (%p1473) target = $region96
        $region95: #{tpu_custom_call.1} parent=91 // pred_region
          %s1476 = sand.u32 %s330, 1
          %s1477 = scalar_lea.sflag [#allocation9], %s1476
          %s1478 = sand.u32 %s330, 1
          %s1479 = smul.addr %s1478, 8
          %s1480 = scalar_lea.vmem [#allocation12], %s1479
          %1481 = dma.done %s1477, 128
        $region96: #{tpu_custom_call.1} parent=91 // pred_fallthru
          _
      $region92: #{tpu_custom_call.1} parent=5 // pred_fallthru
        _
    $region6: #{tpu_custom_call.1} parent=1 // loop_footer
      %s28 = sadd.s32 1, %s24
    $region7: #{tpu_custom_call.1} parent=1 // loop_footer_branch
      %23 = sbr.rel target = $region3
    $region8: #{tpu_custom_call.1} parent=1 // loop_exit
      _
    %1482 = vsyncpa [#allocation8], 1
    %s1483 = scalar_lea.sflag [#allocation8], 1
    %1484 = vsyncpa %s1483, 1
    %1485 = vsyncpa [#allocation11], 1
    %1486 = vsyncpa [#allocation9], 1
    %s1487 = scalar_lea.sflag [#allocation9], 1
    %1488 = vsyncpa %s1487, 1

</llo_original>
